<compile_context>
chip_gen: v7x
topology: tpu7x:2x2x1
jax: 0.10.0
libtpu: 0.0.40
codegen_flags: <defaults>
</compile_context>

<pallas_src>
import jax
import jax.numpy as jnp
from jax.experimental import pallas as pl
from jax.experimental.pallas import tpu as pltpu

LN_EPS = 1e-5  # nn.LayerNorm default


def _round_up(a, b):
    return (a + b - 1) // b * b


def _cdiv(a, b):
    return (a + b - 1) // b


def _patch_embed_kernel(x_ref, w_ref, p_ref, o_ref):
    # x_ref: (tile_tokens, K)   patch pixels (C*ph*pw), possibly bf16
    # w_ref: (K, C_out)         conv weight (resident: constant index_map)
    # p_ref: (8, C_out) f32     row0 = conv bias, row1 = LN gamma, row2 = LN beta
    # o_ref: (tile_tokens, C_out)
    y = jnp.dot(x_ref[...], w_ref[...], preferred_element_type=jnp.float32)
    y = y + p_ref[0:1, :]  # conv bias

    # Single-pass LayerNorm statistics over the channel axis (f32).
    inv_c = jnp.float32(1.0 / y.shape[-1])
    mean = jnp.sum(y, axis=-1, keepdims=True) * inv_c
    ex2 = jnp.sum(y * y, axis=-1, keepdims=True) * inv_c
    # Clamp: E[y^2] - mean^2 can go slightly negative in f32 when |mean| >> std.
    var = jnp.maximum(ex2 - mean * mean, 0.0)

    # Fold gamma into the rsqrt scale; beta added last.
    scale = jax.lax.rsqrt(var + LN_EPS) * p_ref[1:2, :]
    o_ref[...] = ((y - mean) * scale + p_ref[2:3, :]).astype(o_ref.dtype)


def patch_embed_pallas(x, conv_w, conv_b, ln_g, ln_b, patch_size,
                       tile_tokens=256, input_dtype=jnp.bfloat16):
    """x: (B, C_in, H, W) -> (B, C_out, H//ph, W//pw), matches the PyTorch module.

    tile_tokens: token rows per grid step (rounded to a multiple of 128 and
      capped so the grid has >= 2 steps).  Guidance for deep-stage shapes
      (K~1280, C_out~512): v5e f32 stay <= 512, v6e f32 <= 1024, v7x f32 <= 1024
      (only go to 2048 in bf16 — 64 MiB physical VMEM).
    input_dtype: dtype of the token stream + weight feeding the MXU.  Default
      bf16 halves the dominant HBM read; accumulation and LN math stay f32.
      Pass jnp.float32 (or None) for bit-accurate f32.
    """
    B, C, H, W = x.shape
    ph, pw = patch_size
    Ho, Wo = H // ph, W // pw
    C_out = conv_w.shape[0]
    K = C * ph * pw
    out_dtype = x.dtype

    # Crop any remainder rows/cols (a stride==kernel VALID conv ignores them).
    x = x[:, :, :Ho * ph, :Wo * pw]

    # Cast BEFORE the patchify transpose so any materialized token copy is
    # already narrow (kernel is HBM-bound: bytes are the whole game).
    if input_dtype is not None:
        x = x.astype(input_dtype)

    # --- glue: patchify, same flattening order as the conv weight (C, ph, pw)
    xp = x.reshape(B, C, Ho, ph, Wo, pw)
    xp = jnp.transpose(xp, (0, 2, 4, 1, 3, 5)).reshape(B * Ho * Wo, K)

    n_tokens = B * Ho * Wo
    # Tile: multiple of 128; cap so grid >= 2 (v7x megacore) when possible.
    tile_tokens = max(128, _round_up(int(tile_tokens), 128))
    tile_tokens = min(tile_tokens, max(128, _round_up(_cdiv(n_tokens, 2), 128)))
    grid = (_cdiv(n_tokens, tile_tokens),)  # partial final block; no pad waste

    # Unpadded weight + packed bias/gamma/beta (one resident (8, C_out) operand).
    w_mat = conv_w.reshape(C_out, K).T.astype(xp.dtype)  # (K, C_out)
    params = (jnp.zeros((8, C_out), jnp.float32)
              .at[0, :].set(conv_b.astype(jnp.float32))
              .at[1, :].set(ln_g.astype(jnp.float32))
              .at[2, :].set(ln_b.astype(jnp.float32)))

    # Explicit VMEM budget (double-buffered tokens + output, resident weight).
    in_bytes = jnp.dtype(xp.dtype).itemsize
    out_bytes = jnp.dtype(out_dtype).itemsize
    est = (2 * tile_tokens * K * in_bytes
           + 2 * tile_tokens * C_out * out_bytes
           + 2 * K * C_out * in_bytes
           + 2 * 8 * C_out * 4)
    vmem_limit = int(min(64 << 20, max(16 << 20, est * 3 // 2 + (2 << 20))))

    out = pl.pallas_call(
        _patch_embed_kernel,
        out_shape=jax.ShapeDtypeStruct((n_tokens, C_out), out_dtype),
        grid_spec=pltpu.PrefetchScalarGridSpec(
            num_scalar_prefetch=0,
            grid=grid,
            in_specs=[
                pl.BlockSpec((tile_tokens, K), lambda i: (i, 0)),
                pl.BlockSpec((K, C_out), lambda i: (0, 0)),
                pl.BlockSpec((8, C_out), lambda i: (0, 0)),
            ],
            out_specs=pl.BlockSpec((tile_tokens, C_out), lambda i: (i, 0)),
        ),
        compiler_params=pltpu.CompilerParams(
            dimension_semantics=("parallel",),
            # Let XLA fuse the patchify transpose into the pallas input DMA
            # instead of materializing an extra token copy in HBM.
            allow_input_fusion=[True, False, False],
            vmem_limit_bytes=vmem_limit,
        ),
    )(xp, w_mat, params)

    # --- glue: back to (B, C_out, Ho, Wo) like the module
    out = out.reshape(B, Ho, Wo, C_out)
    return jnp.transpose(out, (0, 3, 1, 2))


def reference_jax(x, conv_w, conv_b, ln_g, ln_b, patch_size):
    """Pure-JAX reference mirroring the PyTorch forward (sanity check)."""
    ph, pw = patch_size
    y = jax.lax.conv_general_dilated(
        x, conv_w, window_strides=(ph, pw), padding="VALID",
        dimension_numbers=("NCHW", "OIHW", "NCHW"))
    y = y + conv_b[None, :, None, None]
    B, C, Ho, Wo = y.shape
    t = y.reshape(B, C, Ho * Wo).transpose(0, 2, 1)  # (B, N, C)
    mean = t.mean(-1, keepdims=True)
    var = ((t - mean) ** 2).mean(-1, keepdims=True)
    t = (t - mean) / jnp.sqrt(var + LN_EPS) * ln_g + ln_b
    return t.reshape(B, Ho, Wo, C).transpose(0, 3, 1, 2)


if __name__ == "__main__":
    # Module-default shapes: feature_size=(120, 22), out_channels=64,
    # in_channels=3, patch_size=(4, 4); batch=2.  W=22 exercises the crop
    # path, C_out=64 exercises the narrow (unpadded) output, and 300 tokens
    # exercise the partial final block + grid>=2 cap.
    B, C_in = 2, 3
    H, W = 120, 22
    patch_size = (4, 4)
    C_out = 64

    key = jax.random.PRNGKey(0)
    k_x, k_w, k_b, k_g, k_bb = jax.random.split(key, 5)

    x = jax.random.normal(k_x, (B, C_in, H, W), dtype=jnp.float32)
    conv_w = jax.random.normal(
        k_w, (C_out, C_in, patch_size[0], patch_size[1]), dtype=jnp.float32) * 0.1
    conv_b = jax.random.normal(k_b, (C_out,), dtype=jnp.float32) * 0.1
    ln_g = 1.0 + 0.1 * jax.random.normal(k_g, (C_out,), dtype=jnp.float32)
    ln_b = 0.1 * jax.random.normal(k_bb, (C_out,), dtype=jnp.float32)

    ref = reference_jax(x, conv_w, conv_b, ln_g, ln_b, patch_size)
    Ho, Wo = H // patch_size[0], W // patch_size[1]

    # Exact path (f32 token stream): tight tolerance.
    out_f32 = patch_embed_pallas(x, conv_w, conv_b, ln_g, ln_b, patch_size,
                                 tile_tokens=256, input_dtype=jnp.float32)
    out_f32 = jax.block_until_ready(out_f32)
    assert out_f32.shape == (B, C_out, Ho, Wo), out_f32.shape
    assert jnp.allclose(out_f32, ref, atol=1e-3, rtol=1e-3), \
        float(jnp.max(jnp.abs(out_f32 - ref)))

    # Default fast path (bf16 token stream, f32 accumulate/LN): bf16 tolerance.
    out_bf16 = patch_embed_pallas(x, conv_w, conv_b, ln_g, ln_b, patch_size,
                                  tile_tokens=256)
    out_bf16 = jax.block_until_ready(out_bf16)
    assert out_bf16.shape == (B, C_out, Ho, Wo), out_bf16.shape
    assert jnp.allclose(out_bf16, ref, atol=3e-2, rtol=3e-2), \
        float(jnp.max(jnp.abs(out_bf16 - ref)))

    print("KERNEL_OK")
</pallas_src>

<mosaic_0001>
module attributes {stable_mosaic.version = 11 : i64} {
  func.func @_patch_embed_kernel(%arg0: i32, %arg1: memref<256x48xf32, #tpu.memory_space<vmem>>, %arg2: memref<48x64xf32, #tpu.memory_space<vmem>>, %arg3: memref<8x64xf32, #tpu.memory_space<vmem>>, %arg4: memref<256x64xf32, #tpu.memory_space<vmem>>) attributes {dimension_semantics = [#tpu.dimension_semantics<parallel>], iteration_bounds = array<i64: 2>, scalar_prefetch = 0 : i64, scratch_operands = 0 : i64, tpu.core_type = #tpu.core_type<tc>, window_params = [{transform_indices = @transform_0, window_bounds = array<i64: 256, 48>}, {pipeline_mode = #tpu.pipeline_mode<synchronous>, transform_indices = @transform_1, window_bounds = array<i64: 48, 64>}, {pipeline_mode = #tpu.pipeline_mode<synchronous>, transform_indices = @transform_2, window_bounds = array<i64: 8, 64>}, {transform_indices = @transform_3, window_bounds = array<i64: 256, 64>}]} {
    %c0 = arith.constant 0 : index
    %c0_0 = arith.constant 0 : index
    %0 = vector.load %arg1[%c0, %c0_0] : memref<256x48xf32, #tpu.memory_space<vmem>>, vector<256x48xf32>
    %c0_1 = arith.constant 0 : index
    %c0_2 = arith.constant 0 : index
    %1 = vector.load %arg2[%c0_1, %c0_2] : memref<48x64xf32, #tpu.memory_space<vmem>>, vector<48x64xf32>
    %cst = arith.constant dense<0.000000e+00> : vector<256x64xf32>
    %2 = tpu.matmul %0, %1, %cst {dimension_numbers = #tpu.dot_dimension_numbers<[1], [0], [0], [1], [0, 0, 1, 1], [], []>} : vector<256x48xf32>, vector<48x64xf32>, vector<256x64xf32> -> vector<256x64xf32>
    %c0_3 = arith.constant 0 : index
    %c0_4 = arith.constant 0 : index
    %3 = vector.load %arg3[%c0_3, %c0_4] : memref<8x64xf32, #tpu.memory_space<vmem>>, vector<1x64xf32>
    %4 = vector.broadcast %3 : vector<1x64xf32> to vector<256x64xf32>
    %5 = arith.addf %2, %4 : vector<256x64xf32>
    %cst_5 = arith.constant dense<0.000000e+00> : vector<256xf32>
    %6 = vector.multi_reduction <add>, %5, %cst_5 [1] : vector<256x64xf32> to vector<256xf32>
    %7 = vector.shape_cast %6 : vector<256xf32> to vector<256x1xf32>
    %cst_6 = arith.constant 1.562500e-02 : f32
    %8 = vector.broadcast %cst_6 : f32 to vector<256x1xf32>
    %9 = arith.mulf %7, %8 : vector<256x1xf32>
    %10 = arith.mulf %5, %5 : vector<256x64xf32>
    %cst_7 = arith.constant dense<0.000000e+00> : vector<256xf32>
    %11 = vector.multi_reduction <add>, %10, %cst_7 [1] : vector<256x64xf32> to vector<256xf32>
    %12 = vector.shape_cast %11 : vector<256xf32> to vector<256x1xf32>
    %cst_8 = arith.constant 1.562500e-02 : f32
    %13 = vector.broadcast %cst_8 : f32 to vector<256x1xf32>
    %14 = arith.mulf %12, %13 : vector<256x1xf32>
    %15 = arith.mulf %9, %9 : vector<256x1xf32>
    %16 = arith.subf %14, %15 : vector<256x1xf32>
    %cst_9 = arith.constant 0.000000e+00 : f32
    %17 = vector.broadcast %cst_9 : f32 to vector<256x1xf32>
    %18 = arith.maximumf %16, %17 : vector<256x1xf32>
    %cst_10 = arith.constant 9.99999974E-6 : f32
    %19 = vector.broadcast %cst_10 : f32 to vector<256x1xf32>
    %20 = arith.addf %18, %19 : vector<256x1xf32>
    %21 = math.rsqrt %20 : vector<256x1xf32>
    %c1 = arith.constant 1 : index
    %c0_11 = arith.constant 0 : index
    %22 = vector.load %arg3[%c1, %c0_11] : memref<8x64xf32, #tpu.memory_space<vmem>>, vector<1x64xf32>
    %23 = vector.broadcast %21 : vector<256x1xf32> to vector<256x64xf32>
    %24 = vector.broadcast %22 : vector<1x64xf32> to vector<256x64xf32>
    %25 = arith.mulf %23, %24 : vector<256x64xf32>
    %26 = vector.broadcast %9 : vector<256x1xf32> to vector<256x64xf32>
    %27 = arith.subf %5, %26 : vector<256x64xf32>
    %28 = arith.mulf %27, %25 : vector<256x64xf32>
    %c2 = arith.constant 2 : index
    %c0_12 = arith.constant 0 : index
    %29 = vector.load %arg3[%c2, %c0_12] : memref<8x64xf32, #tpu.memory_space<vmem>>, vector<1x64xf32>
    %30 = vector.broadcast %29 : vector<1x64xf32> to vector<256x64xf32>
    %31 = arith.addf %28, %30 : vector<256x64xf32>
    %c0_13 = arith.constant 0 : index
    %c0_14 = arith.constant 0 : index
    %32 = vector.load %arg4[%c0_13, %c0_14] : memref<256x64xf32, #tpu.memory_space<vmem>>, vector<256x64xf32>
    tpu.vector_store %arg4[%c0_13, %c0_14], %31 {strides = array<i32>} : memref<256x64xf32, #tpu.memory_space<vmem>>, vector<256x64xf32>,
    return
  }
  func.func @transform_0(%arg0: i32) -> (i32, i32) {
    %c0_i32 = arith.constant 0 : i32
    %c0_i32_0 = arith.constant 0 : i32
    return %arg0, %c0_i32 : i32, i32
  }
  func.func @transform_1(%arg0: i32) -> (i32, i32) {
    %c0_i32 = arith.constant 0 : i32
    %c0_i32_0 = arith.constant 0 : i32
    %c0_i32_1 = arith.constant 0 : i32
    return %c0_i32, %c0_i32_0 : i32, i32
  }
  func.func @transform_2(%arg0: i32) -> (i32, i32) {
    %c0_i32 = arith.constant 0 : i32
    %c0_i32_0 = arith.constant 0 : i32
    %c0_i32_1 = arith.constant 0 : i32
    return %c0_i32, %c0_i32_0 : i32, i32
  }
  func.func @transform_3(%arg0: i32) -> (i32, i32) {
    %c0_i32 = arith.constant 0 : i32
    %c0_i32_0 = arith.constant 0 : i32
    return %arg0, %c0_i32 : i32, i32
  }
}

</mosaic_0001>

<llo_original>
// kernel: tpu_custom_call.1
$region0: #{tpu_custom_call.1}
  #allocation0 [shape = 'u32[]', space=smem, size = 0x4, offset = 0x4, fixed_abs, tag = 'smem constant byte address 0x4 - core index']
  #allocation1 [shape = 'u32[144,128]{1,0:T(1,128)}', space=vmem, size = 0x12000, scoped, tag = 'internal scratch']
  %s0 = inlined_call_operand.vmem [shape: f32[300,48], index: 0, kind: input, shape index: {}]
  %s1 = inlined_call_operand.vmem [shape: f32[48,64], index: 1, kind: input, shape index: {}]
  %s2 = inlined_call_operand.vmem [shape: f32[8,64], index: 2, kind: input, shape index: {}]
  %s3 = inlined_call_operand.vmem [shape: f32[300,64], index: 3, kind: output, shape index: {}]
  %s4 = sld [smem:[#allocation0]]
  $region93: #{tpu_custom_call.1} parent=0
    _
  %s6 = ssub.s32 1, %s4
  %s7 = scalar_select 0, %s6, %s4
  $region1: #{tpu_custom_call.1} parent=0
    #allocation2 [shape = 'u8[262144]{0}', space=vmem, size = 0x40000, scoped, tag = 'output window, operand 0']
    loop: start=0, step=1, limit=4
    $region2: #{tpu_custom_call.1} parent=1 // loop_pre_header
      _
    $region3: #{tpu_custom_call.1} parent=1 // loop_header
      %s9 = sphi 0, %s13
      %p10 = scmp.ge.s32.totalorder %s9, 4
      %s19 = sphi 0, %s21
      %s22 = sphi 0, %s19
      %s23 = sphi 0, %s22
      %s39 = sphi 0, %s23
      %s43 = sphi 0, %s43
      %s45 = sphi 0, %s43
      %s46 = sphi 0, %s45
      %s60 = sphi 0, %s46
      %s64 = sphi 0, %s64
      %s66 = sphi 0, %s64
      %s67 = sphi 0, %s66
      %s81 = sphi 0, %s67
      %s87 = sphi 0, %s89
      %s90 = sphi 0, %s87
      %s91 = sphi 0, %s90
      %s107 = sphi 0, %s91
    $region4: #{tpu_custom_call.1} parent=1 // loop_header_branch
      %12 = sbr.rel (%p10) target = $region8
    $region5: #{tpu_custom_call.1} parent=1 // loop_body
      %s14 = ssub.s32 %s9, 1
      %s15 = ssub.s32 %s9, 2
      %s16 = sadd.s32 %s9, 1
      %s17 = ssub.s32 %s9, %s16
      %p18 = scmp.eq.s32.totalorder %s17, 0
      %s20 = sadd.s32 %s19, 1
      %s21 = scalar_select %p18, %s19, %s20
      %p24 = pneg %p18
      %p25 = scmp.eq.s32.totalorder %s9, 1
      %p26 = por %p24, %p25
      %p27 = scmp.ne.s32.totalorder %s19, %s22
      %p28 = scmp.eq.s32.totalorder %s9, 0
      %p29 = por %p27, %p28
      %p30 = scmp.ne.s32.totalorder %s19, %s22
      %p31 = scmp.eq.s32.totalorder %s14, 1
      %p32 = por %p30, %p31
      %p33 = scmp.ne.s32.totalorder %s22, %s23
      %p34 = scmp.eq.s32.totalorder %s14, 0
      %p35 = por %p33, %p34
      %p36 = scmp.ne.s32.totalorder %s22, %s23
      %p37 = scmp.eq.s32.totalorder %s15, 1
      %p38 = por %p36, %p37
      %p40 = scmp.ne.s32.totalorder %s23, %s39
      %p41 = scmp.eq.s32.totalorder %s15, 0
      %p42 = por %p40, %p41
      %s44 = sadd.s32 %s43, 1
      %p47 = scmp.eq.s32.totalorder %s9, 1
      %p48 = scmp.ne.s32.totalorder %s43, %s45
      %p49 = scmp.eq.s32.totalorder %s9, 0
      %p50 = por %p48, %p49
      %p51 = scmp.ne.s32.totalorder %s43, %s45
      %p52 = scmp.eq.s32.totalorder %s14, 1
      %p53 = por %p51, %p52
      %p54 = scmp.ne.s32.totalorder %s45, %s46
      %p55 = scmp.eq.s32.totalorder %s14, 0
      %p56 = por %p54, %p55
      %p57 = scmp.ne.s32.totalorder %s45, %s46
      %p58 = scmp.eq.s32.totalorder %s15, 1
      %p59 = por %p57, %p58
      %p61 = scmp.ne.s32.totalorder %s46, %s60
      %p62 = scmp.eq.s32.totalorder %s15, 0
      %p63 = por %p61, %p62
      %s65 = sadd.s32 %s64, 1
      %p68 = scmp.eq.s32.totalorder %s9, 1
      %p69 = scmp.ne.s32.totalorder %s64, %s66
      %p70 = scmp.eq.s32.totalorder %s9, 0
      %p71 = por %p69, %p70
      %p72 = scmp.ne.s32.totalorder %s64, %s66
      %p73 = scmp.eq.s32.totalorder %s14, 1
      %p74 = por %p72, %p73
      %p75 = scmp.ne.s32.totalorder %s66, %s67
      %p76 = scmp.eq.s32.totalorder %s14, 0
      %p77 = por %p75, %p76
      %p78 = scmp.ne.s32.totalorder %s66, %s67
      %p79 = scmp.eq.s32.totalorder %s15, 1
      %p80 = por %p78, %p79
      %p82 = scmp.ne.s32.totalorder %s67, %s81
      %p83 = scmp.eq.s32.totalorder %s15, 0
      %p84 = por %p82, %p83
      %s85 = ssub.s32 %s9, %s16
      %p86 = scmp.eq.s32.totalorder %s85, 0
      %s88 = sadd.s32 %s87, 1
      %s89 = scalar_select %p86, %s87, %s88
      %p92 = pneg %p86
      %p93 = scmp.eq.s32.totalorder %s9, 1
      %p94 = por %p92, %p93
      %p95 = scmp.ne.s32.totalorder %s87, %s90
      %p96 = scmp.eq.s32.totalorder %s9, 0
      %p97 = por %p95, %p96
      %p98 = scmp.ne.s32.totalorder %s87, %s90
      %p99 = scmp.eq.s32.totalorder %s14, 1
      %p100 = por %p98, %p99
      %p101 = scmp.ne.s32.totalorder %s90, %s91
      %p102 = scmp.eq.s32.totalorder %s14, 0
      %p103 = por %p101, %p102
      %p104 = scmp.ne.s32.totalorder %s90, %s91
      %p105 = scmp.eq.s32.totalorder %s15, 1
      %p106 = por %p104, %p105
      %p108 = scmp.ne.s32.totalorder %s91, %s107
      %p109 = scmp.eq.s32.totalorder %s15, 0
      %p110 = por %p108, %p109
      %p111 = scmp.le.s32.totalorder 1, %s9
      %p112 = scmp.lt.s32.totalorder %s9, 3
      %p113 = pnand %p111, %p112
      %p114 = pneg %p113
      // Predicated region
      $region9: #{tpu_custom_call.1} parent=5 // pred_check
        _
      $region10: #{tpu_custom_call.1} parent=5 // pred_check_branch
        %116 = sbr.rel (%p113) target = $region12
      $region11: #{tpu_custom_call.1} parent=5 // pred_region
        %s117 = ssub.s32 %s9, 1
        // Predicated region
        $region13: #{tpu_custom_call.1} parent=11 // pred_check
          %p118 = pneg %p56
        $region14: #{tpu_custom_call.1} parent=11 // pred_check_branch
          %120 = sbr.rel (%p118) target = $region16
        $region15: #{tpu_custom_call.1} parent=11 // pred_region
          _
        $region16: #{tpu_custom_call.1} parent=11 // pred_fallthru
          _
        // Predicated region
        $region17: #{tpu_custom_call.1} parent=11 // pred_check
          %p121 = pneg %p77
        $region18: #{tpu_custom_call.1} parent=11 // pred_check_branch
          %123 = sbr.rel (%p121) target = $region20
        $region19: #{tpu_custom_call.1} parent=11 // pred_region
          _
        $region20: #{tpu_custom_call.1} parent=11 // pred_fallthru
          _
      $region12: #{tpu_custom_call.1} parent=5 // pred_fallthru
        _
      %p124 = scmp.lt.s32.totalorder %s9, 2
      // Predicated region
      $region21: #{tpu_custom_call.1} parent=5 // pred_check
        %p125 = pneg %p124
      $region22: #{tpu_custom_call.1} parent=5 // pred_check_branch
        %127 = sbr.rel (%p125) target = $region24
      $region23: #{tpu_custom_call.1} parent=5 // pred_region
        // Predicated region
        $region25: #{tpu_custom_call.1} parent=23 // pred_check
          %p128 = pneg %p29
        $region26: #{tpu_custom_call.1} parent=23 // pred_check_branch
          %130 = sbr.rel (%p128) target = $region28
        $region27: #{tpu_custom_call.1} parent=23 // pred_region
          %s131 = smul.u32 32, %s9
          %s132 = ssub.s32 38, %s131
          %p133 = scmp.lt.s32.totalorder %s132, 32
          %s134 = scalar_select %p133, %s132, 32
          %s135 = smul.u32 128, %s134
          %p136 = scmp.lt.s32.totalorder %s131, 37
          %s137 = scalar_select %p136, %s131, 37
          %s138 = smul.addr %s137, 8
          %s139 = scalar_lea.vmem %s0, %s138
          %s140 = smul.u32 32, %s9
          %s141 = ssub.s32 38, %s140
          %p142 = scmp.lt.s32.totalorder %s141, 32
          %s143 = scalar_select %p142, %s141, 32
          %s144 = smul.u32 128, %s143
        $region28: #{tpu_custom_call.1} parent=23 // pred_fallthru
          _
      $region24: #{tpu_custom_call.1} parent=5 // pred_fallthru
        _
      %p145 = scmp.le.s32.totalorder 1, %s9
      %p146 = scmp.lt.s32.totalorder %s9, 3
      %p147 = pnand %p145, %p146
      %p148 = pneg %p147
      // Predicated region
      $region29: #{tpu_custom_call.1} parent=5 // pred_check
        _
      $region30: #{tpu_custom_call.1} parent=5 // pred_check_branch
        %150 = sbr.rel (%p147) target = $region32
      $region31: #{tpu_custom_call.1} parent=5 // pred_region
        %s151 = ssub.s32 %s9, 1
        %s152 = smul.u32 32, %s14
        %s153 = ssub.s32 38, %s152
        %p154 = scmp.lt.s32.totalorder %s153, 32
        %s155 = scalar_select %p154, %s153, 32
        %s156 = smul.u32 128, %s155
        %p157 = scmp.lt.s32.totalorder %s152, 37
        %s158 = scalar_select %p157, %s152, 37
        %s159 = smul.addr %s158, 8
        %s160 = scalar_lea.vmem %s0, %s159
        %p161 = pneg %p35
        %p162 = pneg %p32
        %p163 = pneg %p56
        %p164 = pneg %p53
        %p165 = pneg %p77
        %p166 = pneg %p74
        %p167 = pneg %p103
        %p168 = pneg %p100
        %s169 = sand.u32 %s90, 1
        %s170 = sand.u32 %s90, 1
        %s171 = smul.addr %s170, 256
        %s172 = scalar_lea.vmem [#allocation2], %s171
        %s173 = smul.u32 32, %s14
        %s174 = ssub.s32 38, %s173
        %p175 = scmp.lt.s32.totalorder %s174, 32
        %s176 = scalar_select %p175, %s174, 32
        %s177 = smul.u32 128, %s176
        %p178 = scmp.lt.s32.totalorder %s173, 37
        %s179 = scalar_select %p178, %s173, 37
        %s180 = smul.addr %s179, 8
        %s181 = scalar_lea.vmem %s0, %s180
        %s182 = smul.u32 32, %s14
        %s183 = ssub.s32 38, %s182
        %p184 = scmp.lt.s32.totalorder %s183, 32
        %s185 = scalar_select %p184, %s183, 32
        %s186 = smul.u32 128, %s185
        %s187 = smul.u32 32, %s14
        %s188 = ssub.s32 38, %s187
        %p189 = scmp.lt.s32.totalorder %s188, 32
        %s190 = scalar_select %p189, %s188, 32
        %s191 = smul.u32 128, %s190
        %v192 = vld [vmem:[%s181] sm:$0xff]
        %v193 = vld [vmem:[%s181 + $0x8] sm:$0xff]
        %v194 = vld [vmem:[%s181 + $0x10] sm:$0xff]
        %v195 = vld [vmem:[%s181 + $0x18] sm:$0xff]
        %v196 = vld [vmem:[%s181 + $0x20] sm:$0xff]
        %v197 = vld [vmem:[%s181 + $0x28] sm:$0xff]
        %v198 = vld [vmem:[%s181 + $0x30] sm:$0xff]
        %v199 = vld [vmem:[%s181 + $0x38] sm:$0xff]
        %v200 = vld [vmem:[%s181 + $0x40] sm:$0xff]
        %v201 = vld [vmem:[%s181 + $0x48] sm:$0xff]
        %v202 = vld [vmem:[%s181 + $0x50] sm:$0xff]
        %v203 = vld [vmem:[%s181 + $0x58] sm:$0xff]
        %v204 = vld [vmem:[%s181 + $0x60] sm:$0xff]
        %v205 = vld [vmem:[%s181 + $0x68] sm:$0xff]
        %v206 = vld [vmem:[%s181 + $0x70] sm:$0xff]
        %v207 = vld [vmem:[%s181 + $0x78] sm:$0xff]
        %v208 = vld [vmem:[%s181 + $0x80] sm:$0xff]
        %v209 = vld [vmem:[%s181 + $0x88] sm:$0xff]
        %v210 = vld [vmem:[%s181 + $0x90] sm:$0xff]
        %v211 = vld [vmem:[%s181 + $0x98] sm:$0xff]
        %v212 = vld [vmem:[%s181 + $0xa0] sm:$0xff]
        %v213 = vld [vmem:[%s181 + $0xa8] sm:$0xff]
        %v214 = vld [vmem:[%s181 + $0xb0] sm:$0xff]
        %v215 = vld [vmem:[%s181 + $0xb8] sm:$0xff]
        %v216 = vld [vmem:[%s181 + $0xc0] sm:$0xff]
        %v217 = vld [vmem:[%s181 + $0xc8] sm:$0xff]
        %v218 = vld [vmem:[%s181 + $0xd0] sm:$0xff]
        %v219 = vld [vmem:[%s181 + $0xd8] sm:$0xff]
        %v220 = vld [vmem:[%s181 + $0xe0] sm:$0xff]
        %v221 = vld [vmem:[%s181 + $0xe8] sm:$0xff]
        %v222 = vld [vmem:[%s181 + $0xf0] sm:$0xff]
        %v223 = vld [vmem:[%s181 + $0xf8] sm:$0xff]
        %v224 = vld [vmem:[%s1] sm:$0xff]
        %v225 = vld [vmem:[%s1 + $0x8] sm:$0xff]
        %v226 = vld [vmem:[%s1 + $0x10] sm:$0xff]
        %v227 = vld [vmem:[%s1 + $0x18] sm:$0xff]
        %v228 = vld [vmem:[%s1 + $0x20] sm:$0xff]
        %v229 = vld [vmem:[%s1 + $0x28] sm:$0xff]
        %v230 = vld [vmem:[%s2] sm:$0x1]
        %v231 = vlaneseq
        %v232 = vshrl.u32 %v231, 7
        %v233 = vsub.s32 0, %v232
        %v234 = vrot.slane %v230, %v233
        %vm235 = vcmask 392192
        %v237 = vsel %vm235, %v192, 0
        %v240 = vsel %vm235, %v193, 0
        %v243 = vsel %vm235, %v194, 0
        %v246 = vsel %vm235, %v195, 0
        %v249 = vsel %vm235, %v196, 0
        %v252 = vsel %vm235, %v197, 0
        %v255 = vsel %vm235, %v198, 0
        %v258 = vsel %vm235, %v199, 0
        %v261 = vsel %vm235, %v200, 0
        %v264 = vsel %vm235, %v201, 0
        %v267 = vsel %vm235, %v202, 0
        %v270 = vsel %vm235, %v203, 0
        %v273 = vsel %vm235, %v204, 0
        %v276 = vsel %vm235, %v205, 0
        %v279 = vsel %vm235, %v206, 0
        %v282 = vsel %vm235, %v207, 0
        %v285 = vsel %vm235, %v208, 0
        %v288 = vsel %vm235, %v209, 0
        %v291 = vsel %vm235, %v210, 0
        %v294 = vsel %vm235, %v211, 0
        %v297 = vsel %vm235, %v212, 0
        %v300 = vsel %vm235, %v213, 0
        %v303 = vsel %vm235, %v214, 0
        %v306 = vsel %vm235, %v215, 0
        %v309 = vsel %vm235, %v216, 0
        %v312 = vsel %vm235, %v217, 0
        %v315 = vsel %vm235, %v218, 0
        %v318 = vsel %vm235, %v219, 0
        %v321 = vsel %vm235, %v220, 0
        %v324 = vsel %vm235, %v221, 0
        %v327 = vsel %vm235, %v222, 0
        %v330 = vsel %vm235, %v223, 0
        %332 = vmatprep.subr.mxu0 0.0
        %333 = vmatpush1.msra.mxu0 %v224
        %334 = vmatprep.subr.mxu0 0.0
        %335 = vmatpush1.msra.mxu0 %v225
        %336 = vmatprep.subr.mxu0 0.0
        %337 = vmatpush1.msra.mxu0 %v226
        %338 = vmatprep.subr.mxu0 0.0
        %339 = vmatpush1.msra.mxu0 %v227
        %340 = vmatprep.subr.mxu0 0.0
        %341 = vmatpush1.msra.mxu0 %v228
        %342 = vmatprep.subr.mxu0 0.0
        %343 = vmatpush1.msra.mxu0 %v229
        %344 = vmatprep.subr.mxu0 0.0
        %345 = vmatpush1.msra.mxu0 0.0
        %346 = vmatprep.subr.mxu0 0.0
        %347 = vmatpush1.msra.mxu0 0.0
        %348 = vmatprep.subr.mxu0 0.0
        %349 = vmatpush1.msra.mxu0 0.0
        %350 = vmatprep.subr.mxu0 0.0
        %351 = vmatpush1.msra.mxu0 0.0
        %352 = vmatprep.subr.mxu0 0.0
        %353 = vmatpush1.msra.mxu0 0.0
        %354 = vmatprep.subr.mxu0 0.0
        %355 = vmatpush1.msra.mxu0 0.0
        %356 = vmatprep.subr.mxu0 0.0
        %357 = vmatpush1.msra.mxu0 0.0
        %358 = vmatprep.subr.mxu0 0.0
        %359 = vmatpush1.msra.mxu0 0.0
        %360 = vmatprep.subr.mxu0 0.0
        %361 = vmatpush1.msra.mxu0 0.0
        %362 = vmatprep.subr.mxu0 0.0
        %363 = vmatpush1.msra.mxu0 0.0
        %364 = vmatprep.subr.mxu0 0.0
        %365 = vmatpush1.msra.mxu0 0.0
        %366 = vmatprep.subr.mxu0 0.0
        %367 = vmatpush1.msra.mxu0 0.0
        %368 = vmatprep.subr.mxu0 0.0
        %369 = vmatpush1.msra.mxu0 0.0
        %370 = vmatprep.subr.mxu0 0.0
        %371 = vmatpush1.msra.mxu0 0.0
        %372 = vmatprep.subr.mxu0 0.0
        %373 = vmatpush1.msra.mxu0 0.0
        %374 = vmatprep.subr.mxu0 0.0
        %375 = vmatpush1.msra.mxu0 0.0
        %376 = vmatprep.subr.mxu0 0.0
        %377 = vmatpush1.msra.mxu0 0.0
        %378 = vmatprep.subr.mxu0 0.0
        %379 = vmatpush1.msra.mxu0 0.0
        %380 = vmatprep.subr.mxu0 0.0
        %381 = vmatpush1.msra.mxu0 0.0
        %382 = vmatprep.subr.mxu0 0.0
        %383 = vmatpush1.msra.mxu0 0.0
        %384 = vmatprep.subr.mxu0 0.0
        %385 = vmatpush1.msra.mxu0 0.0
        %386 = vmatprep.subr.mxu0 0.0
        %387 = vmatpush1.msra.mxu0 0.0
        %388 = vmatprep.subr.mxu0 0.0
        %389 = vmatpush1.msra.mxu0 0.0
        %390 = vmatprep.subr.mxu0 0.0
        %391 = vmatpush1.msra.mxu0 0.0
        %392 = vmatprep.subr.mxu0 0.0
        %393 = vmatpush1.msra.mxu0 0.0
        %394 = vmatprep.subr.mxu0 0.0
        %395 = vmatpush1.msra.mxu0 0.0
        %396 = vmatprep.mubr.f32.mxu0 0.0
        %397 = vmatmul.mubr.f32.gmra.mrb[0].mxu0 %v237
        %v398 = vpop.f32.mrb[0].mxu0
        %v399 = vadd.f32 %v234, %v398
        %v400 = vpop.f32.mrb[0].mxu0
        %401 = vmatprep.mubr.f32.mxu0 0.0
        %402 = vmatmul.mubr.f32.gmra.mrb[0].mxu0 %v240
        %v403 = vpop.f32.mrb[0].mxu0
        %v404 = vadd.f32 %v234, %v403
        %v405 = vpop.f32.mrb[0].mxu0
        %406 = vmatprep.mubr.f32.mxu0 0.0
        %407 = vmatmul.mubr.f32.gmra.mrb[0].mxu0 %v243
        %v408 = vpop.f32.mrb[0].mxu0
        %v409 = vadd.f32 %v234, %v408
        %v410 = vpop.f32.mrb[0].mxu0
        %411 = vmatprep.mubr.f32.mxu0 0.0
        %412 = vmatmul.mubr.f32.gmra.mrb[0].mxu0 %v246
        %v413 = vpop.f32.mrb[0].mxu0
        %v414 = vadd.f32 %v234, %v413
        %v415 = vpop.f32.mrb[0].mxu0
        %416 = vmatprep.mubr.f32.mxu0 0.0
        %417 = vmatmul.mubr.f32.gmra.mrb[0].mxu0 %v249
        %v418 = vpop.f32.mrb[0].mxu0
        %v419 = vadd.f32 %v234, %v418
        %v420 = vpop.f32.mrb[0].mxu0
        %421 = vmatprep.mubr.f32.mxu0 0.0
        %422 = vmatmul.mubr.f32.gmra.mrb[0].mxu0 %v252
        %v423 = vpop.f32.mrb[0].mxu0
        %v424 = vadd.f32 %v234, %v423
        %v425 = vpop.f32.mrb[0].mxu0
        %426 = vmatprep.mubr.f32.mxu0 0.0
        %427 = vmatmul.mubr.f32.gmra.mrb[0].mxu0 %v255
        %v428 = vpop.f32.mrb[0].mxu0
        %v429 = vadd.f32 %v234, %v428
        %v430 = vpop.f32.mrb[0].mxu0
        %431 = vmatprep.mubr.f32.mxu0 0.0
        %432 = vmatmul.mubr.f32.gmra.mrb[0].mxu0 %v258
        %v433 = vpop.f32.mrb[0].mxu0
        %v434 = vadd.f32 %v234, %v433
        %v435 = vpop.f32.mrb[0].mxu0
        %436 = vmatprep.mubr.f32.mxu0 0.0
        %437 = vmatmul.mubr.f32.gmra.mrb[0].mxu0 %v261
        %v438 = vpop.f32.mrb[0].mxu0
        %v439 = vadd.f32 %v234, %v438
        %v440 = vpop.f32.mrb[0].mxu0
        %441 = vmatprep.mubr.f32.mxu0 0.0
        %442 = vmatmul.mubr.f32.gmra.mrb[0].mxu0 %v264
        %v443 = vpop.f32.mrb[0].mxu0
        %v444 = vadd.f32 %v234, %v443
        %v445 = vpop.f32.mrb[0].mxu0
        %446 = vmatprep.mubr.f32.mxu0 0.0
        %447 = vmatmul.mubr.f32.gmra.mrb[0].mxu0 %v267
        %v448 = vpop.f32.mrb[0].mxu0
        %v449 = vadd.f32 %v234, %v448
        %v450 = vpop.f32.mrb[0].mxu0
        %451 = vmatprep.mubr.f32.mxu0 0.0
        %452 = vmatmul.mubr.f32.gmra.mrb[0].mxu0 %v270
        %v453 = vpop.f32.mrb[0].mxu0
        %v454 = vadd.f32 %v234, %v453
        %v455 = vpop.f32.mrb[0].mxu0
        %456 = vmatprep.mubr.f32.mxu0 0.0
        %457 = vmatmul.mubr.f32.gmra.mrb[0].mxu0 %v273
        %v458 = vpop.f32.mrb[0].mxu0
        %v459 = vadd.f32 %v234, %v458
        %v460 = vpop.f32.mrb[0].mxu0
        %461 = vmatprep.mubr.f32.mxu0 0.0
        %462 = vmatmul.mubr.f32.gmra.mrb[0].mxu0 %v276
        %v463 = vpop.f32.mrb[0].mxu0
        %v464 = vadd.f32 %v234, %v463
        %v465 = vpop.f32.mrb[0].mxu0
        %466 = vmatprep.mubr.f32.mxu0 0.0
        %467 = vmatmul.mubr.f32.gmra.mrb[0].mxu0 %v279
        %v468 = vpop.f32.mrb[0].mxu0
        %v469 = vadd.f32 %v234, %v468
        %v470 = vpop.f32.mrb[0].mxu0
        %471 = vmatprep.mubr.f32.mxu0 0.0
        %472 = vmatmul.mubr.f32.gmra.mrb[0].mxu0 %v282
        %v473 = vpop.f32.mrb[0].mxu0
        %v474 = vadd.f32 %v234, %v473
        %v475 = vpop.f32.mrb[0].mxu0
        %476 = vmatprep.mubr.f32.mxu0 0.0
        %477 = vmatmul.mubr.f32.gmra.mrb[0].mxu0 %v285
        %v478 = vpop.f32.mrb[0].mxu0
        %v479 = vadd.f32 %v234, %v478
        %v480 = vpop.f32.mrb[0].mxu0
        %481 = vmatprep.mubr.f32.mxu0 0.0
        %482 = vmatmul.mubr.f32.gmra.mrb[0].mxu0 %v288
        %v483 = vpop.f32.mrb[0].mxu0
        %v484 = vadd.f32 %v234, %v483
        %v485 = vpop.f32.mrb[0].mxu0
        %486 = vmatprep.mubr.f32.mxu0 0.0
        %487 = vmatmul.mubr.f32.gmra.mrb[0].mxu0 %v291
        %v488 = vpop.f32.mrb[0].mxu0
        %v489 = vadd.f32 %v234, %v488
        %v490 = vpop.f32.mrb[0].mxu0
        %491 = vmatprep.mubr.f32.mxu0 0.0
        %492 = vmatmul.mubr.f32.gmra.mrb[0].mxu0 %v294
        %v493 = vpop.f32.mrb[0].mxu0
        %v494 = vadd.f32 %v234, %v493
        %v495 = vpop.f32.mrb[0].mxu0
        %496 = vmatprep.mubr.f32.mxu0 0.0
        %497 = vmatmul.mubr.f32.gmra.mrb[0].mxu0 %v297
        %v498 = vpop.f32.mrb[0].mxu0
        %v499 = vadd.f32 %v234, %v498
        %v500 = vpop.f32.mrb[0].mxu0
        %501 = vmatprep.mubr.f32.mxu0 0.0
        %502 = vmatmul.mubr.f32.gmra.mrb[0].mxu0 %v300
        %v503 = vpop.f32.mrb[0].mxu0
        %v504 = vadd.f32 %v234, %v503
        %v505 = vpop.f32.mrb[0].mxu0
        %506 = vmatprep.mubr.f32.mxu0 0.0
        %507 = vmatmul.mubr.f32.gmra.mrb[0].mxu0 %v303
        %v508 = vpop.f32.mrb[0].mxu0
        %v509 = vadd.f32 %v234, %v508
        %v510 = vpop.f32.mrb[0].mxu0
        %511 = vmatprep.mubr.f32.mxu0 0.0
        %512 = vmatmul.mubr.f32.gmra.mrb[0].mxu0 %v306
        %v513 = vpop.f32.mrb[0].mxu0
        %v514 = vadd.f32 %v234, %v513
        %v515 = vpop.f32.mrb[0].mxu0
        %516 = vmatprep.mubr.f32.mxu0 0.0
        %517 = vmatmul.mubr.f32.gmra.mrb[0].mxu0 %v309
        %v518 = vpop.f32.mrb[0].mxu0
        %v519 = vadd.f32 %v234, %v518
        %v520 = vpop.f32.mrb[0].mxu0
        %521 = vmatprep.mubr.f32.mxu0 0.0
        %522 = vmatmul.mubr.f32.gmra.mrb[0].mxu0 %v312
        %v523 = vpop.f32.mrb[0].mxu0
        %v524 = vadd.f32 %v234, %v523
        %v525 = vpop.f32.mrb[0].mxu0
        %526 = vmatprep.mubr.f32.mxu0 0.0
        %527 = vmatmul.mubr.f32.gmra.mrb[0].mxu0 %v315
        %v528 = vpop.f32.mrb[0].mxu0
        %v529 = vadd.f32 %v234, %v528
        %v530 = vpop.f32.mrb[0].mxu0
        %531 = vmatprep.mubr.f32.mxu0 0.0
        %532 = vmatmul.mubr.f32.gmra.mrb[0].mxu0 %v318
        %v533 = vpop.f32.mrb[0].mxu0
        %v534 = vadd.f32 %v234, %v533
        %v535 = vpop.f32.mrb[0].mxu0
        %536 = vmatprep.mubr.f32.mxu0 0.0
        %537 = vmatmul.mubr.f32.gmra.mrb[0].mxu0 %v321
        %v538 = vpop.f32.mrb[0].mxu0
        %v539 = vadd.f32 %v234, %v538
        %v540 = vpop.f32.mrb[0].mxu0
        %541 = vmatprep.mubr.f32.mxu0 0.0
        %542 = vmatmul.mubr.f32.gmra.mrb[0].mxu0 %v324
        %v543 = vpop.f32.mrb[0].mxu0
        %v544 = vadd.f32 %v234, %v543
        %v545 = vpop.f32.mrb[0].mxu0
        %546 = vmatprep.mubr.f32.mxu0 0.0
        %547 = vmatmul.mubr.f32.gmra.mrb[0].mxu0 %v327
        %v548 = vpop.f32.mrb[0].mxu0
        %v549 = vadd.f32 %v234, %v548
        %v550 = vpop.f32.mrb[0].mxu0
        %551 = vmatprep.mubr.f32.mxu0 0.0
        %552 = vmatmul.mubr.f32.gmra.mrb[0].mxu0 %v330
        %v553 = vpop.f32.mrb[0].mxu0
        %v554 = vadd.f32 %v234, %v553
        %v555 = vpop.f32.mrb[0].mxu0
        %556 = vdwg.mxu0
        %vm557 = vcmask 523264
        %v558 = vsel %vm557, %v399, 0.0
        %559 = vadd.xlane.f32.xlu0 %v558
        %v560 = vpop.xlane.xlu0 %559
        %v561 = vsel %vm557, %v404, 0.0
        %562 = vadd.xlane.f32.xlu0 %v561
        %v563 = vpop.xlane.xlu0 %562
        %v564 = vsel %vm557, %v409, 0.0
        %565 = vadd.xlane.f32.xlu0 %v564
        %v566 = vpop.xlane.xlu0 %565
        %v567 = vsel %vm557, %v414, 0.0
        %568 = vadd.xlane.f32.xlu0 %v567
        %v569 = vpop.xlane.xlu0 %568
        %v570 = vsel %vm557, %v419, 0.0
        %571 = vadd.xlane.f32.xlu0 %v570
        %v572 = vpop.xlane.xlu0 %571
        %v573 = vsel %vm557, %v424, 0.0
        %574 = vadd.xlane.f32.xlu0 %v573
        %v575 = vpop.xlane.xlu0 %574
        %v576 = vsel %vm557, %v429, 0.0
        %577 = vadd.xlane.f32.xlu0 %v576
        %v578 = vpop.xlane.xlu0 %577
        %v579 = vsel %vm557, %v434, 0.0
        %580 = vadd.xlane.f32.xlu0 %v579
        %v581 = vpop.xlane.xlu0 %580
        %v582 = vsel %vm557, %v439, 0.0
        %583 = vadd.xlane.f32.xlu0 %v582
        %v584 = vpop.xlane.xlu0 %583
        %v585 = vsel %vm557, %v444, 0.0
        %586 = vadd.xlane.f32.xlu0 %v585
        %v587 = vpop.xlane.xlu0 %586
        %v588 = vsel %vm557, %v449, 0.0
        %589 = vadd.xlane.f32.xlu0 %v588
        %v590 = vpop.xlane.xlu0 %589
        %v591 = vsel %vm557, %v454, 0.0
        %592 = vadd.xlane.f32.xlu0 %v591
        %v593 = vpop.xlane.xlu0 %592
        %v594 = vsel %vm557, %v459, 0.0
        %595 = vadd.xlane.f32.xlu0 %v594
        %v596 = vpop.xlane.xlu0 %595
        %v597 = vsel %vm557, %v464, 0.0
        %598 = vadd.xlane.f32.xlu0 %v597
        %v599 = vpop.xlane.xlu0 %598
        %v600 = vsel %vm557, %v469, 0.0
        %601 = vadd.xlane.f32.xlu0 %v600
        %v602 = vpop.xlane.xlu0 %601
        %v603 = vsel %vm557, %v474, 0.0
        %604 = vadd.xlane.f32.xlu0 %v603
        %v605 = vpop.xlane.xlu0 %604
        %v606 = vsel %vm557, %v479, 0.0
        %607 = vadd.xlane.f32.xlu0 %v606
        %v608 = vpop.xlane.xlu0 %607
        %v609 = vsel %vm557, %v484, 0.0
        %610 = vadd.xlane.f32.xlu0 %v609
        %v611 = vpop.xlane.xlu0 %610
        %v612 = vsel %vm557, %v489, 0.0
        %613 = vadd.xlane.f32.xlu0 %v612
        %v614 = vpop.xlane.xlu0 %613
        %v615 = vsel %vm557, %v494, 0.0
        %616 = vadd.xlane.f32.xlu0 %v615
        %v617 = vpop.xlane.xlu0 %616
        %v618 = vsel %vm557, %v499, 0.0
        %619 = vadd.xlane.f32.xlu0 %v618
        %v620 = vpop.xlane.xlu0 %619
        %v621 = vsel %vm557, %v504, 0.0
        %622 = vadd.xlane.f32.xlu0 %v621
        %v623 = vpop.xlane.xlu0 %622
        %v624 = vsel %vm557, %v509, 0.0
        %625 = vadd.xlane.f32.xlu0 %v624
        %v626 = vpop.xlane.xlu0 %625
        %v627 = vsel %vm557, %v514, 0.0
        %628 = vadd.xlane.f32.xlu0 %v627
        %v629 = vpop.xlane.xlu0 %628
        %v630 = vsel %vm557, %v519, 0.0
        %631 = vadd.xlane.f32.xlu0 %v630
        %v632 = vpop.xlane.xlu0 %631
        %v633 = vsel %vm557, %v524, 0.0
        %634 = vadd.xlane.f32.xlu0 %v633
        %v635 = vpop.xlane.xlu0 %634
        %v636 = vsel %vm557, %v529, 0.0
        %637 = vadd.xlane.f32.xlu0 %v636
        %v638 = vpop.xlane.xlu0 %637
        %v639 = vsel %vm557, %v534, 0.0
        %640 = vadd.xlane.f32.xlu0 %v639
        %v641 = vpop.xlane.xlu0 %640
        %v642 = vsel %vm557, %v539, 0.0
        %643 = vadd.xlane.f32.xlu0 %v642
        %v644 = vpop.xlane.xlu0 %643
        %v645 = vsel %vm557, %v544, 0.0
        %646 = vadd.xlane.f32.xlu0 %v645
        %v647 = vpop.xlane.xlu0 %646
        %v648 = vsel %vm557, %v549, 0.0
        %649 = vadd.xlane.f32.xlu0 %v648
        %v650 = vpop.xlane.xlu0 %649
        %v651 = vsel %vm557, %v554, 0.0
        %652 = vadd.xlane.f32.xlu0 %v651
        %v653 = vpop.xlane.xlu0 %652
        %v654 = vmul.f32 %v560, 0.015625
        %v655 = vmul.f32 %v563, 0.015625
        %v656 = vmul.f32 %v566, 0.015625
        %v657 = vmul.f32 %v569, 0.015625
        %v658 = vmul.f32 %v572, 0.015625
        %v659 = vmul.f32 %v575, 0.015625
        %v660 = vmul.f32 %v578, 0.015625
        %v661 = vmul.f32 %v581, 0.015625
        %v662 = vmul.f32 %v584, 0.015625
        %v663 = vmul.f32 %v587, 0.015625
        %v664 = vmul.f32 %v590, 0.015625
        %v665 = vmul.f32 %v593, 0.015625
        %v666 = vmul.f32 %v596, 0.015625
        %v667 = vmul.f32 %v599, 0.015625
        %v668 = vmul.f32 %v602, 0.015625
        %v669 = vmul.f32 %v605, 0.015625
        %v670 = vmul.f32 %v608, 0.015625
        %v671 = vmul.f32 %v611, 0.015625
        %v672 = vmul.f32 %v614, 0.015625
        %v673 = vmul.f32 %v617, 0.015625
        %v674 = vmul.f32 %v620, 0.015625
        %v675 = vmul.f32 %v623, 0.015625
        %v676 = vmul.f32 %v626, 0.015625
        %v677 = vmul.f32 %v629, 0.015625
        %v678 = vmul.f32 %v632, 0.015625
        %v679 = vmul.f32 %v635, 0.015625
        %v680 = vmul.f32 %v638, 0.015625
        %v681 = vmul.f32 %v641, 0.015625
        %v682 = vmul.f32 %v644, 0.015625
        %v683 = vmul.f32 %v647, 0.015625
        %v684 = vmul.f32 %v650, 0.015625
        %v685 = vmul.f32 %v653, 0.015625
        %v686 = vmul.f32 %v399, %v399
        %v687 = vmul.f32 %v404, %v404
        %v688 = vmul.f32 %v409, %v409
        %v689 = vmul.f32 %v414, %v414
        %v690 = vmul.f32 %v419, %v419
        %v691 = vmul.f32 %v424, %v424
        %v692 = vmul.f32 %v429, %v429
        %v693 = vmul.f32 %v434, %v434
        %v694 = vmul.f32 %v439, %v439
        %v695 = vmul.f32 %v444, %v444
        %v696 = vmul.f32 %v449, %v449
        %v697 = vmul.f32 %v454, %v454
        %v698 = vmul.f32 %v459, %v459
        %v699 = vmul.f32 %v464, %v464
        %v700 = vmul.f32 %v469, %v469
        %v701 = vmul.f32 %v474, %v474
        %v702 = vmul.f32 %v479, %v479
        %v703 = vmul.f32 %v484, %v484
        %v704 = vmul.f32 %v489, %v489
        %v705 = vmul.f32 %v494, %v494
        %v706 = vmul.f32 %v499, %v499
        %v707 = vmul.f32 %v504, %v504
        %v708 = vmul.f32 %v509, %v509
        %v709 = vmul.f32 %v514, %v514
        %v710 = vmul.f32 %v519, %v519
        %v711 = vmul.f32 %v524, %v524
        %v712 = vmul.f32 %v529, %v529
        %v713 = vmul.f32 %v534, %v534
        %v714 = vmul.f32 %v539, %v539
        %v715 = vmul.f32 %v544, %v544
        %v716 = vmul.f32 %v549, %v549
        %v717 = vmul.f32 %v554, %v554
        %v718 = vsel %vm557, %v686, 0.0
        %719 = vadd.xlane.f32.xlu0 %v718
        %v720 = vpop.xlane.xlu0 %719
        %v721 = vsel %vm557, %v687, 0.0
        %722 = vadd.xlane.f32.xlu0 %v721
        %v723 = vpop.xlane.xlu0 %722
        %v724 = vsel %vm557, %v688, 0.0
        %725 = vadd.xlane.f32.xlu0 %v724
        %v726 = vpop.xlane.xlu0 %725
        %v727 = vsel %vm557, %v689, 0.0
        %728 = vadd.xlane.f32.xlu0 %v727
        %v729 = vpop.xlane.xlu0 %728
        %v730 = vsel %vm557, %v690, 0.0
        %731 = vadd.xlane.f32.xlu0 %v730
        %v732 = vpop.xlane.xlu0 %731
        %v733 = vsel %vm557, %v691, 0.0
        %734 = vadd.xlane.f32.xlu0 %v733
        %v735 = vpop.xlane.xlu0 %734
        %v736 = vsel %vm557, %v692, 0.0
        %737 = vadd.xlane.f32.xlu0 %v736
        %v738 = vpop.xlane.xlu0 %737
        %v739 = vsel %vm557, %v693, 0.0
        %740 = vadd.xlane.f32.xlu0 %v739
        %v741 = vpop.xlane.xlu0 %740
        %v742 = vsel %vm557, %v694, 0.0
        %743 = vadd.xlane.f32.xlu0 %v742
        %v744 = vpop.xlane.xlu0 %743
        %v745 = vsel %vm557, %v695, 0.0
        %746 = vadd.xlane.f32.xlu0 %v745
        %v747 = vpop.xlane.xlu0 %746
        %v748 = vsel %vm557, %v696, 0.0
        %749 = vadd.xlane.f32.xlu0 %v748
        %v750 = vpop.xlane.xlu0 %749
        %v751 = vsel %vm557, %v697, 0.0
        %752 = vadd.xlane.f32.xlu0 %v751
        %v753 = vpop.xlane.xlu0 %752
        %v754 = vsel %vm557, %v698, 0.0
        %755 = vadd.xlane.f32.xlu0 %v754
        %v756 = vpop.xlane.xlu0 %755
        %v757 = vsel %vm557, %v699, 0.0
        %758 = vadd.xlane.f32.xlu0 %v757
        %v759 = vpop.xlane.xlu0 %758
        %v760 = vsel %vm557, %v700, 0.0
        %761 = vadd.xlane.f32.xlu0 %v760
        %v762 = vpop.xlane.xlu0 %761
        %v763 = vsel %vm557, %v701, 0.0
        %764 = vadd.xlane.f32.xlu0 %v763
        %v765 = vpop.xlane.xlu0 %764
        %v766 = vsel %vm557, %v702, 0.0
        %767 = vadd.xlane.f32.xlu0 %v766
        %v768 = vpop.xlane.xlu0 %767
        %v769 = vsel %vm557, %v703, 0.0
        %770 = vadd.xlane.f32.xlu0 %v769
        %v771 = vpop.xlane.xlu0 %770
        %v772 = vsel %vm557, %v704, 0.0
        %773 = vadd.xlane.f32.xlu0 %v772
        %v774 = vpop.xlane.xlu0 %773
        %v775 = vsel %vm557, %v705, 0.0
        %776 = vadd.xlane.f32.xlu0 %v775
        %v777 = vpop.xlane.xlu0 %776
        %v778 = vsel %vm557, %v706, 0.0
        %779 = vadd.xlane.f32.xlu0 %v778
        %v780 = vpop.xlane.xlu0 %779
        %v781 = vsel %vm557, %v707, 0.0
        %782 = vadd.xlane.f32.xlu0 %v781
        %v783 = vpop.xlane.xlu0 %782
        %v784 = vsel %vm557, %v708, 0.0
        %785 = vadd.xlane.f32.xlu0 %v784
        %v786 = vpop.xlane.xlu0 %785
        %v787 = vsel %vm557, %v709, 0.0
        %788 = vadd.xlane.f32.xlu0 %v787
        %v789 = vpop.xlane.xlu0 %788
        %v790 = vsel %vm557, %v710, 0.0
        %791 = vadd.xlane.f32.xlu0 %v790
        %v792 = vpop.xlane.xlu0 %791
        %v793 = vsel %vm557, %v711, 0.0
        %794 = vadd.xlane.f32.xlu0 %v793
        %v795 = vpop.xlane.xlu0 %794
        %v796 = vsel %vm557, %v712, 0.0
        %797 = vadd.xlane.f32.xlu0 %v796
        %v798 = vpop.xlane.xlu0 %797
        %v799 = vsel %vm557, %v713, 0.0
        %800 = vadd.xlane.f32.xlu0 %v799
        %v801 = vpop.xlane.xlu0 %800
        %v802 = vsel %vm557, %v714, 0.0
        %803 = vadd.xlane.f32.xlu0 %v802
        %v804 = vpop.xlane.xlu0 %803
        %v805 = vsel %vm557, %v715, 0.0
        %806 = vadd.xlane.f32.xlu0 %v805
        %v807 = vpop.xlane.xlu0 %806
        %v808 = vsel %vm557, %v716, 0.0
        %809 = vadd.xlane.f32.xlu0 %v808
        %v810 = vpop.xlane.xlu0 %809
        %v811 = vsel %vm557, %v717, 0.0
        %812 = vadd.xlane.f32.xlu0 %v811
        %v813 = vpop.xlane.xlu0 %812
        %v814 = vmul.f32 %v720, 0.015625
        %v815 = vmul.f32 %v723, 0.015625
        %v816 = vmul.f32 %v726, 0.015625
        %v817 = vmul.f32 %v729, 0.015625
        %v818 = vmul.f32 %v732, 0.015625
        %v819 = vmul.f32 %v735, 0.015625
        %v820 = vmul.f32 %v738, 0.015625
        %v821 = vmul.f32 %v741, 0.015625
        %v822 = vmul.f32 %v744, 0.015625
        %v823 = vmul.f32 %v747, 0.015625
        %v824 = vmul.f32 %v750, 0.015625
        %v825 = vmul.f32 %v753, 0.015625
        %v826 = vmul.f32 %v756, 0.015625
        %v827 = vmul.f32 %v759, 0.015625
        %v828 = vmul.f32 %v762, 0.015625
        %v829 = vmul.f32 %v765, 0.015625
        %v830 = vmul.f32 %v768, 0.015625
        %v831 = vmul.f32 %v771, 0.015625
        %v832 = vmul.f32 %v774, 0.015625
        %v833 = vmul.f32 %v777, 0.015625
        %v834 = vmul.f32 %v780, 0.015625
        %v835 = vmul.f32 %v783, 0.015625
        %v836 = vmul.f32 %v786, 0.015625
        %v837 = vmul.f32 %v789, 0.015625
        %v838 = vmul.f32 %v792, 0.015625
        %v839 = vmul.f32 %v795, 0.015625
        %v840 = vmul.f32 %v798, 0.015625
        %v841 = vmul.f32 %v801, 0.015625
        %v842 = vmul.f32 %v804, 0.015625
        %v843 = vmul.f32 %v807, 0.015625
        %v844 = vmul.f32 %v810, 0.015625
        %v845 = vmul.f32 %v813, 0.015625
        %v846 = vmul.f32 %v654, %v654
        %v847 = vmul.f32 %v655, %v655
        %v848 = vmul.f32 %v656, %v656
        %v849 = vmul.f32 %v657, %v657
        %v850 = vmul.f32 %v658, %v658
        %v851 = vmul.f32 %v659, %v659
        %v852 = vmul.f32 %v660, %v660
        %v853 = vmul.f32 %v661, %v661
        %v854 = vmul.f32 %v662, %v662
        %v855 = vmul.f32 %v663, %v663
        %v856 = vmul.f32 %v664, %v664
        %v857 = vmul.f32 %v665, %v665
        %v858 = vmul.f32 %v666, %v666
        %v859 = vmul.f32 %v667, %v667
        %v860 = vmul.f32 %v668, %v668
        %v861 = vmul.f32 %v669, %v669
        %v862 = vmul.f32 %v670, %v670
        %v863 = vmul.f32 %v671, %v671
        %v864 = vmul.f32 %v672, %v672
        %v865 = vmul.f32 %v673, %v673
        %v866 = vmul.f32 %v674, %v674
        %v867 = vmul.f32 %v675, %v675
        %v868 = vmul.f32 %v676, %v676
        %v869 = vmul.f32 %v677, %v677
        %v870 = vmul.f32 %v678, %v678
        %v871 = vmul.f32 %v679, %v679
        %v872 = vmul.f32 %v680, %v680
        %v873 = vmul.f32 %v681, %v681
        %v874 = vmul.f32 %v682, %v682
        %v875 = vmul.f32 %v683, %v683
        %v876 = vmul.f32 %v684, %v684
        %v877 = vmul.f32 %v685, %v685
        %v878 = vsub.f32 %v814, %v846
        %v879 = vsub.f32 %v815, %v847
        %v880 = vsub.f32 %v816, %v848
        %v881 = vsub.f32 %v817, %v849
        %v882 = vsub.f32 %v818, %v850
        %v883 = vsub.f32 %v819, %v851
        %v884 = vsub.f32 %v820, %v852
        %v885 = vsub.f32 %v821, %v853
        %v886 = vsub.f32 %v822, %v854
        %v887 = vsub.f32 %v823, %v855
        %v888 = vsub.f32 %v824, %v856
        %v889 = vsub.f32 %v825, %v857
        %v890 = vsub.f32 %v826, %v858
        %v891 = vsub.f32 %v827, %v859
        %v892 = vsub.f32 %v828, %v860
        %v893 = vsub.f32 %v829, %v861
        %v894 = vsub.f32 %v830, %v862
        %v895 = vsub.f32 %v831, %v863
        %v896 = vsub.f32 %v832, %v864
        %v897 = vsub.f32 %v833, %v865
        %v898 = vsub.f32 %v834, %v866
        %v899 = vsub.f32 %v835, %v867
        %v900 = vsub.f32 %v836, %v868
        %v901 = vsub.f32 %v837, %v869
        %v902 = vsub.f32 %v838, %v870
        %v903 = vsub.f32 %v839, %v871
        %v904 = vsub.f32 %v840, %v872
        %v905 = vsub.f32 %v841, %v873
        %v906 = vsub.f32 %v842, %v874
        %v907 = vsub.f32 %v843, %v875
        %v908 = vsub.f32 %v844, %v876
        %v909 = vsub.f32 %v845, %v877
        %v910 = vmax.f32 %v878, 0.0
        %v911 = vmax.f32 %v879, 0.0
        %v912 = vmax.f32 %v880, 0.0
        %v913 = vmax.f32 %v881, 0.0
        %v914 = vmax.f32 %v882, 0.0
        %v915 = vmax.f32 %v883, 0.0
        %v916 = vmax.f32 %v884, 0.0
        %v917 = vmax.f32 %v885, 0.0
        %v918 = vmax.f32 %v886, 0.0
        %v919 = vmax.f32 %v887, 0.0
        %v920 = vmax.f32 %v888, 0.0
        %v921 = vmax.f32 %v889, 0.0
        %v922 = vmax.f32 %v890, 0.0
        %v923 = vmax.f32 %v891, 0.0
        %v924 = vmax.f32 %v892, 0.0
        %v925 = vmax.f32 %v893, 0.0
        %v926 = vmax.f32 %v894, 0.0
        %v927 = vmax.f32 %v895, 0.0
        %v928 = vmax.f32 %v896, 0.0
        %v929 = vmax.f32 %v897, 0.0
        %v930 = vmax.f32 %v898, 0.0
        %v931 = vmax.f32 %v899, 0.0
        %v932 = vmax.f32 %v900, 0.0
        %v933 = vmax.f32 %v901, 0.0
        %v934 = vmax.f32 %v902, 0.0
        %v935 = vmax.f32 %v903, 0.0
        %v936 = vmax.f32 %v904, 0.0
        %v937 = vmax.f32 %v905, 0.0
        %v938 = vmax.f32 %v906, 0.0
        %v939 = vmax.f32 %v907, 0.0
        %v940 = vmax.f32 %v908, 0.0
        %v941 = vmax.f32 %v909, 0.0
        %v942 = vadd.f32 %v910, 1e-05
        %v943 = vadd.f32 %v911, 1e-05
        %v944 = vadd.f32 %v912, 1e-05
        %v945 = vadd.f32 %v913, 1e-05
        %v946 = vadd.f32 %v914, 1e-05
        %v947 = vadd.f32 %v915, 1e-05
        %v948 = vadd.f32 %v916, 1e-05
        %v949 = vadd.f32 %v917, 1e-05
        %v950 = vadd.f32 %v918, 1e-05
        %v951 = vadd.f32 %v919, 1e-05
        %v952 = vadd.f32 %v920, 1e-05
        %v953 = vadd.f32 %v921, 1e-05
        %v954 = vadd.f32 %v922, 1e-05
        %v955 = vadd.f32 %v923, 1e-05
        %v956 = vadd.f32 %v924, 1e-05
        %v957 = vadd.f32 %v925, 1e-05
        %v958 = vadd.f32 %v926, 1e-05
        %v959 = vadd.f32 %v927, 1e-05
        %v960 = vadd.f32 %v928, 1e-05
        %v961 = vadd.f32 %v929, 1e-05
        %v962 = vadd.f32 %v930, 1e-05
        %v963 = vadd.f32 %v931, 1e-05
        %v964 = vadd.f32 %v932, 1e-05
        %v965 = vadd.f32 %v933, 1e-05
        %v966 = vadd.f32 %v934, 1e-05
        %v967 = vadd.f32 %v935, 1e-05
        %v968 = vadd.f32 %v936, 1e-05
        %v969 = vadd.f32 %v937, 1e-05
        %v970 = vadd.f32 %v938, 1e-05
        %v971 = vadd.f32 %v939, 1e-05
        %v972 = vadd.f32 %v940, 1e-05
        %v973 = vadd.f32 %v941, 1e-05
        %v974 = vrsqrt.pop %v942
        %v975 = vrsqrt.pop %v943
        %v976 = vrsqrt.pop %v944
        %v977 = vrsqrt.pop %v945
        %v978 = vrsqrt.pop %v946
        %v979 = vrsqrt.pop %v947
        %v980 = vrsqrt.pop %v948
        %v981 = vrsqrt.pop %v949
        %v982 = vrsqrt.pop %v950
        %v983 = vrsqrt.pop %v951
        %v984 = vrsqrt.pop %v952
        %v985 = vrsqrt.pop %v953
        %v986 = vrsqrt.pop %v954
        %v987 = vrsqrt.pop %v955
        %v988 = vrsqrt.pop %v956
        %v989 = vrsqrt.pop %v957
        %v990 = vrsqrt.pop %v958
        %v991 = vrsqrt.pop %v959
        %v992 = vrsqrt.pop %v960
        %v993 = vrsqrt.pop %v961
        %v994 = vrsqrt.pop %v962
        %v995 = vrsqrt.pop %v963
        %v996 = vrsqrt.pop %v964
        %v997 = vrsqrt.pop %v965
        %v998 = vrsqrt.pop %v966
        %v999 = vrsqrt.pop %v967
        %v1000 = vrsqrt.pop %v968
        %v1001 = vrsqrt.pop %v969
        %v1002 = vrsqrt.pop %v970
        %v1003 = vrsqrt.pop %v971
        %v1004 = vrsqrt.pop %v972
        %v1005 = vrsqrt.pop %v973
        %v1006 = vld [vmem:[%s2 + $0x1] sm:$0x1]
        %v1007 = vlaneseq
        %v1008 = vshrl.u32 %v1007, 7
        %v1009 = vsub.s32 0, %v1008
        %v1010 = vrot.slane %v1006, %v1009
        %v1011 = vmul.f32 %v974, %v1010
        %v1012 = vmul.f32 %v975, %v1010
        %v1013 = vmul.f32 %v976, %v1010
        %v1014 = vmul.f32 %v977, %v1010
        %v1015 = vmul.f32 %v978, %v1010
        %v1016 = vmul.f32 %v979, %v1010
        %v1017 = vmul.f32 %v980, %v1010
        %v1018 = vmul.f32 %v981, %v1010
        %v1019 = vmul.f32 %v982, %v1010
        %v1020 = vmul.f32 %v983, %v1010
        %v1021 = vmul.f32 %v984, %v1010
        %v1022 = vmul.f32 %v985, %v1010
        %v1023 = vmul.f32 %v986, %v1010
        %v1024 = vmul.f32 %v987, %v1010
        %v1025 = vmul.f32 %v988, %v1010
        %v1026 = vmul.f32 %v989, %v1010
        %v1027 = vmul.f32 %v990, %v1010
        %v1028 = vmul.f32 %v991, %v1010
        %v1029 = vmul.f32 %v992, %v1010
        %v1030 = vmul.f32 %v993, %v1010
        %v1031 = vmul.f32 %v994, %v1010
        %v1032 = vmul.f32 %v995, %v1010
        %v1033 = vmul.f32 %v996, %v1010
        %v1034 = vmul.f32 %v997, %v1010
        %v1035 = vmul.f32 %v998, %v1010
        %v1036 = vmul.f32 %v999, %v1010
        %v1037 = vmul.f32 %v1000, %v1010
        %v1038 = vmul.f32 %v1001, %v1010
        %v1039 = vmul.f32 %v1002, %v1010
        %v1040 = vmul.f32 %v1003, %v1010
        %v1041 = vmul.f32 %v1004, %v1010
        %v1042 = vmul.f32 %v1005, %v1010
        %v1043 = vsub.f32 %v399, %v654
        %v1044 = vsub.f32 %v404, %v655
        %v1045 = vsub.f32 %v409, %v656
        %v1046 = vsub.f32 %v414, %v657
        %v1047 = vsub.f32 %v419, %v658
        %v1048 = vsub.f32 %v424, %v659
        %v1049 = vsub.f32 %v429, %v660
        %v1050 = vsub.f32 %v434, %v661
        %v1051 = vsub.f32 %v439, %v662
        %v1052 = vsub.f32 %v444, %v663
        %v1053 = vsub.f32 %v449, %v664
        %v1054 = vsub.f32 %v454, %v665
        %v1055 = vsub.f32 %v459, %v666
        %v1056 = vsub.f32 %v464, %v667
        %v1057 = vsub.f32 %v469, %v668
        %v1058 = vsub.f32 %v474, %v669
        %v1059 = vsub.f32 %v479, %v670
        %v1060 = vsub.f32 %v484, %v671
        %v1061 = vsub.f32 %v489, %v672
        %v1062 = vsub.f32 %v494, %v673
        %v1063 = vsub.f32 %v499, %v674
        %v1064 = vsub.f32 %v504, %v675
        %v1065 = vsub.f32 %v509, %v676
        %v1066 = vsub.f32 %v514, %v677
        %v1067 = vsub.f32 %v519, %v678
        %v1068 = vsub.f32 %v524, %v679
        %v1069 = vsub.f32 %v529, %v680
        %v1070 = vsub.f32 %v534, %v681
        %v1071 = vsub.f32 %v539, %v682
        %v1072 = vsub.f32 %v544, %v683
        %v1073 = vsub.f32 %v549, %v684
        %v1074 = vsub.f32 %v554, %v685
        %v1075 = vmul.f32 %v1043, %v1011
        %v1076 = vmul.f32 %v1044, %v1012
        %v1077 = vmul.f32 %v1045, %v1013
        %v1078 = vmul.f32 %v1046, %v1014
        %v1079 = vmul.f32 %v1047, %v1015
        %v1080 = vmul.f32 %v1048, %v1016
        %v1081 = vmul.f32 %v1049, %v1017
        %v1082 = vmul.f32 %v1050, %v1018
        %v1083 = vmul.f32 %v1051, %v1019
        %v1084 = vmul.f32 %v1052, %v1020
        %v1085 = vmul.f32 %v1053, %v1021
        %v1086 = vmul.f32 %v1054, %v1022
        %v1087 = vmul.f32 %v1055, %v1023
        %v1088 = vmul.f32 %v1056, %v1024
        %v1089 = vmul.f32 %v1057, %v1025
        %v1090 = vmul.f32 %v1058, %v1026
        %v1091 = vmul.f32 %v1059, %v1027
        %v1092 = vmul.f32 %v1060, %v1028
        %v1093 = vmul.f32 %v1061, %v1029
        %v1094 = vmul.f32 %v1062, %v1030
        %v1095 = vmul.f32 %v1063, %v1031
        %v1096 = vmul.f32 %v1064, %v1032
        %v1097 = vmul.f32 %v1065, %v1033
        %v1098 = vmul.f32 %v1066, %v1034
        %v1099 = vmul.f32 %v1067, %v1035
        %v1100 = vmul.f32 %v1068, %v1036
        %v1101 = vmul.f32 %v1069, %v1037
        %v1102 = vmul.f32 %v1070, %v1038
        %v1103 = vmul.f32 %v1071, %v1039
        %v1104 = vmul.f32 %v1072, %v1040
        %v1105 = vmul.f32 %v1073, %v1041
        %v1106 = vmul.f32 %v1074, %v1042
        %v1107 = vld [vmem:[%s2 + $0x2] sm:$0x1]
        %v1108 = vlaneseq
        %v1109 = vshrl.u32 %v1108, 7
        %v1110 = vsub.s32 0, %v1109
        %v1111 = vrot.slane %v1107, %v1110
        %v1112 = vadd.f32 %v1075, %v1111
        %v1113 = vadd.f32 %v1076, %v1111
        %v1114 = vadd.f32 %v1077, %v1111
        %v1115 = vadd.f32 %v1078, %v1111
        %v1116 = vadd.f32 %v1079, %v1111
        %v1117 = vadd.f32 %v1080, %v1111
        %v1118 = vadd.f32 %v1081, %v1111
        %v1119 = vadd.f32 %v1082, %v1111
        %v1120 = vadd.f32 %v1083, %v1111
        %v1121 = vadd.f32 %v1084, %v1111
        %v1122 = vadd.f32 %v1085, %v1111
        %v1123 = vadd.f32 %v1086, %v1111
        %v1124 = vadd.f32 %v1087, %v1111
        %v1125 = vadd.f32 %v1088, %v1111
        %v1126 = vadd.f32 %v1089, %v1111
        %v1127 = vadd.f32 %v1090, %v1111
        %v1128 = vadd.f32 %v1091, %v1111
        %v1129 = vadd.f32 %v1092, %v1111
        %v1130 = vadd.f32 %v1093, %v1111
        %v1131 = vadd.f32 %v1094, %v1111
        %v1132 = vadd.f32 %v1095, %v1111
        %v1133 = vadd.f32 %v1096, %v1111
        %v1134 = vadd.f32 %v1097, %v1111
        %v1135 = vadd.f32 %v1098, %v1111
        %v1136 = vadd.f32 %v1099, %v1111
        %v1137 = vadd.f32 %v1100, %v1111
        %v1138 = vadd.f32 %v1101, %v1111
        %v1139 = vadd.f32 %v1102, %v1111
        %v1140 = vadd.f32 %v1103, %v1111
        %v1141 = vadd.f32 %v1104, %v1111
        %v1142 = vadd.f32 %v1105, %v1111
        %v1143 = vadd.f32 %v1106, %v1111
        %1144 = vst.msk [vmem:[%s172] sm:$0xff] %vm557, %v1112
        %1145 = vst.msk [vmem:[%s172 + $0x8] sm:$0xff] %vm557, %v1113
        %1146 = vst.msk [vmem:[%s172 + $0x10] sm:$0xff] %vm557, %v1114
        %1147 = vst.msk [vmem:[%s172 + $0x18] sm:$0xff] %vm557, %v1115
        %1148 = vst.msk [vmem:[%s172 + $0x20] sm:$0xff] %vm557, %v1116
        %1149 = vst.msk [vmem:[%s172 + $0x28] sm:$0xff] %vm557, %v1117
        %1150 = vst.msk [vmem:[%s172 + $0x30] sm:$0xff] %vm557, %v1118
        %1151 = vst.msk [vmem:[%s172 + $0x38] sm:$0xff] %vm557, %v1119
        %1152 = vst.msk [vmem:[%s172 + $0x40] sm:$0xff] %vm557, %v1120
        %1153 = vst.msk [vmem:[%s172 + $0x48] sm:$0xff] %vm557, %v1121
        %1154 = vst.msk [vmem:[%s172 + $0x50] sm:$0xff] %vm557, %v1122
        %1155 = vst.msk [vmem:[%s172 + $0x58] sm:$0xff] %vm557, %v1123
        %1156 = vst.msk [vmem:[%s172 + $0x60] sm:$0xff] %vm557, %v1124
        %1157 = vst.msk [vmem:[%s172 + $0x68] sm:$0xff] %vm557, %v1125
        %1158 = vst.msk [vmem:[%s172 + $0x70] sm:$0xff] %vm557, %v1126
        %1159 = vst.msk [vmem:[%s172 + $0x78] sm:$0xff] %vm557, %v1127
        %1160 = vst.msk [vmem:[%s172 + $0x80] sm:$0xff] %vm557, %v1128
        %1161 = vst.msk [vmem:[%s172 + $0x88] sm:$0xff] %vm557, %v1129
        %1162 = vst.msk [vmem:[%s172 + $0x90] sm:$0xff] %vm557, %v1130
        %1163 = vst.msk [vmem:[%s172 + $0x98] sm:$0xff] %vm557, %v1131
        %1164 = vst.msk [vmem:[%s172 + $0xa0] sm:$0xff] %vm557, %v1132
        %1165 = vst.msk [vmem:[%s172 + $0xa8] sm:$0xff] %vm557, %v1133
        %1166 = vst.msk [vmem:[%s172 + $0xb0] sm:$0xff] %vm557, %v1134
        %1167 = vst.msk [vmem:[%s172 + $0xb8] sm:$0xff] %vm557, %v1135
        %1168 = vst.msk [vmem:[%s172 + $0xc0] sm:$0xff] %vm557, %v1136
        %1169 = vst.msk [vmem:[%s172 + $0xc8] sm:$0xff] %vm557, %v1137
        %1170 = vst.msk [vmem:[%s172 + $0xd0] sm:$0xff] %vm557, %v1138
        %1171 = vst.msk [vmem:[%s172 + $0xd8] sm:$0xff] %vm557, %v1139
        %1172 = vst.msk [vmem:[%s172 + $0xe0] sm:$0xff] %vm557, %v1140
        %1173 = vst.msk [vmem:[%s172 + $0xe8] sm:$0xff] %vm557, %v1141
        %1174 = vst.msk [vmem:[%s172 + $0xf0] sm:$0xff] %vm557, %v1142
        %1175 = vst.msk [vmem:[%s172 + $0xf8] sm:$0xff] %vm557, %v1143
        %s1176 = sand.u32 %s90, 1
        %s1177 = sand.u32 %s90, 1
        %s1178 = smul.addr %s1177, 256
        %s1179 = scalar_lea.vmem [#allocation2], %s1178
        // Predicated region
        $region33: #{tpu_custom_call.1} parent=31 // pred_check
          %p1180 = pneg %p100
        $region34: #{tpu_custom_call.1} parent=31 // pred_check_branch
          %1182 = sbr.rel (%p1180) target = $region36
        $region35: #{tpu_custom_call.1} parent=31 // pred_region
          %s1183 = smul.u32 32, %s14
          %s1184 = ssub.s32 38, %s1183
          %p1185 = scmp.lt.s32.totalorder %s1184, 32
          %s1186 = scalar_select %p1185, %s1184, 32
          %s1187 = smul.u32 128, %s1186
          %p1188 = scmp.ne.s32.totalorder 0, %s1187
          %s1189 = smul.addr %s1183, 8
          %s1190 = scalar_lea.vmem %s3, %s1189
          // Predicated region
          $region37: #{tpu_custom_call.1} parent=35 // pred_check
            %p1191 = pneg %p1188
          $region38: #{tpu_custom_call.1} parent=35 // pred_check_branch
            %1193 = sbr.rel (%p1191) target = $region40
          $region39: #{tpu_custom_call.1} parent=35 // pred_region
            // Predicated region
            $region41: #{tpu_custom_call.1} parent=39 // pred_check
              _
            $region42: #{tpu_custom_call.1} parent=39 // pred_check_branch
              %1195 = sbr.rel (0) target = $region44
            $region43: #{tpu_custom_call.1} parent=39 // pred_region
              // Predicated region
              $region63: #{tpu_custom_call.1} parent=43 // pred_check
                _
              $region64: #{tpu_custom_call.1} parent=43 // pred_check_branch
                %1306 = sbr.rel (0) target = $region66
              $region65: #{tpu_custom_call.1} parent=43 // pred_region
                %s1307 = sshrl.u32 %s1186, 5
                // While loop
                $region67: #{tpu_custom_call.1} parent=65 // loop_pre_header
                  _
                $region68: #{tpu_custom_call.1} parent=65 // loop_header
                  %s1309 = sphi 0, %s1311
                  %p1310 = scmp.ge.s32.totalorder %s1309, %s1307
                  %s1314 = sphi 0, %s1383
                  %s1315 = sphi %s1179, %s1386
                  %s1316 = sphi %s1190, %s1387
                $region69: #{tpu_custom_call.1} parent=65 // loop_header_branch
                  %1313 = sbr.rel (%p1310) target = $region73
                $region70: #{tpu_custom_call.1} parent=65 // loop_body
                  %v1317 = vld [vmem:[%s1315] sm:$0xff]
                  %1318 = vst [vmem:[%s1316] sm:$0xff] %v1317
                  %v1319 = vld [vmem:[%s1315 + $0x8] sm:$0xff]
                  %1320 = vst [vmem:[%s1316 + $0x8] sm:$0xff] %v1319
                  %v1321 = vld [vmem:[%s1315 + $0x10] sm:$0xff]
                  %1322 = vst [vmem:[%s1316 + $0x10] sm:$0xff] %v1321
                  %v1323 = vld [vmem:[%s1315 + $0x18] sm:$0xff]
                  %1324 = vst [vmem:[%s1316 + $0x18] sm:$0xff] %v1323
                  %v1325 = vld [vmem:[%s1315 + $0x20] sm:$0xff]
                  %1326 = vst [vmem:[%s1316 + $0x20] sm:$0xff] %v1325
                  %v1327 = vld [vmem:[%s1315 + $0x28] sm:$0xff]
                  %1328 = vst [vmem:[%s1316 + $0x28] sm:$0xff] %v1327
                  %v1329 = vld [vmem:[%s1315 + $0x30] sm:$0xff]
                  %1330 = vst [vmem:[%s1316 + $0x30] sm:$0xff] %v1329
                  %v1331 = vld [vmem:[%s1315 + $0x38] sm:$0xff]
                  %1332 = vst [vmem:[%s1316 + $0x38] sm:$0xff] %v1331
                  %v1333 = vld [vmem:[%s1315 + $0x40] sm:$0xff]
                  %1334 = vst [vmem:[%s1316 + $0x40] sm:$0xff] %v1333
                  %v1335 = vld [vmem:[%s1315 + $0x48] sm:$0xff]
                  %1336 = vst [vmem:[%s1316 + $0x48] sm:$0xff] %v1335
                  %v1337 = vld [vmem:[%s1315 + $0x50] sm:$0xff]
                  %1338 = vst [vmem:[%s1316 + $0x50] sm:$0xff] %v1337
                  %v1339 = vld [vmem:[%s1315 + $0x58] sm:$0xff]
                  %1340 = vst [vmem:[%s1316 + $0x58] sm:$0xff] %v1339
                  %v1341 = vld [vmem:[%s1315 + $0x60] sm:$0xff]
                  %1342 = vst [vmem:[%s1316 + $0x60] sm:$0xff] %v1341
                  %v1343 = vld [vmem:[%s1315 + $0x68] sm:$0xff]
                  %1344 = vst [vmem:[%s1316 + $0x68] sm:$0xff] %v1343
                  %v1345 = vld [vmem:[%s1315 + $0x70] sm:$0xff]
                  %1346 = vst [vmem:[%s1316 + $0x70] sm:$0xff] %v1345
                  %v1347 = vld [vmem:[%s1315 + $0x78] sm:$0xff]
                  %1348 = vst [vmem:[%s1316 + $0x78] sm:$0xff] %v1347
                  %v1349 = vld [vmem:[%s1315 + $0x80] sm:$0xff]
                  %1350 = vst [vmem:[%s1316 + $0x80] sm:$0xff] %v1349
                  %v1351 = vld [vmem:[%s1315 + $0x88] sm:$0xff]
                  %1352 = vst [vmem:[%s1316 + $0x88] sm:$0xff] %v1351
                  %v1353 = vld [vmem:[%s1315 + $0x90] sm:$0xff]
                  %1354 = vst [vmem:[%s1316 + $0x90] sm:$0xff] %v1353
                  %v1355 = vld [vmem:[%s1315 + $0x98] sm:$0xff]
                  %1356 = vst [vmem:[%s1316 + $0x98] sm:$0xff] %v1355
                  %v1357 = vld [vmem:[%s1315 + $0xa0] sm:$0xff]
                  %1358 = vst [vmem:[%s1316 + $0xa0] sm:$0xff] %v1357
                  %v1359 = vld [vmem:[%s1315 + $0xa8] sm:$0xff]
                  %1360 = vst [vmem:[%s1316 + $0xa8] sm:$0xff] %v1359
                  %v1361 = vld [vmem:[%s1315 + $0xb0] sm:$0xff]
                  %1362 = vst [vmem:[%s1316 + $0xb0] sm:$0xff] %v1361
                  %v1363 = vld [vmem:[%s1315 + $0xb8] sm:$0xff]
                  %1364 = vst [vmem:[%s1316 + $0xb8] sm:$0xff] %v1363
                  %v1365 = vld [vmem:[%s1315 + $0xc0] sm:$0xff]
                  %1366 = vst [vmem:[%s1316 + $0xc0] sm:$0xff] %v1365
                  %v1367 = vld [vmem:[%s1315 + $0xc8] sm:$0xff]
                  %1368 = vst [vmem:[%s1316 + $0xc8] sm:$0xff] %v1367
                  %v1369 = vld [vmem:[%s1315 + $0xd0] sm:$0xff]
                  %1370 = vst [vmem:[%s1316 + $0xd0] sm:$0xff] %v1369
                  %v1371 = vld [vmem:[%s1315 + $0xd8] sm:$0xff]
                  %1372 = vst [vmem:[%s1316 + $0xd8] sm:$0xff] %v1371
                  %v1373 = vld [vmem:[%s1315 + $0xe0] sm:$0xff]
                  %1374 = vst [vmem:[%s1316 + $0xe0] sm:$0xff] %v1373
                  %v1375 = vld [vmem:[%s1315 + $0xe8] sm:$0xff]
                  %1376 = vst [vmem:[%s1316 + $0xe8] sm:$0xff] %v1375
                  %v1377 = vld [vmem:[%s1315 + $0xf0] sm:$0xff]
                  %1378 = vst [vmem:[%s1316 + $0xf0] sm:$0xff] %v1377
                  %v1379 = vld [vmem:[%s1315 + $0xf8] sm:$0xff]
                  %1380 = vst [vmem:[%s1316 + $0xf8] sm:$0xff] %v1379
                  %s1381 = sadd.s32 1, %s1314
                  %p1382 = scmp.ge.s32.totalorder %s1381, %s1307
                  %s1383 = scalar_select %p1382, 0, %s1381
                  %s1384 = smul.u32 %s1383, 256
                  %s1385 = smul.u32 %s1383, 256
                  %s1386 = scalar_lea.vmem %s1179, %s1384 [#allocation2]
                  %s1387 = scalar_lea.vmem %s1190, %s1385
                $region71: #{tpu_custom_call.1} parent=65 // loop_footer
                  %s1311 = sadd.s32 %s1309, 1
                $region72: #{tpu_custom_call.1} parent=65 // loop_footer_branch
                  %1308 = sbr.rel target = $region68
                $region73: #{tpu_custom_call.1} parent=65 // loop_exit
                  _
                %s1388 = sshrl.u32 %s1186, 5
                %s1389 = sand.u32 %s1186, 31
                %s1390 = smul.u32 %s1388, 32
                %s1391 = smul.u32 8, %s1390
                %s1392 = scalar_lea.vmem %s1179, %s1391 [#allocation2]
                %s1393 = smul.u32 8, %s1390
                %s1394 = scalar_lea.vmem %s1190, %s1393
                // While loop
                $region74: #{tpu_custom_call.1} parent=65 // loop_pre_header
                  _
                $region75: #{tpu_custom_call.1} parent=65 // loop_header
                  %s1396 = sphi 0, %s1398
                  %p1397 = scmp.ge.s32.totalorder %s1396, %s1389
                  %s1401 = sphi 0, %s1408
                  %s1402 = sphi %s1392, %s1411
                  %s1403 = sphi %s1394, %s1412
                $region76: #{tpu_custom_call.1} parent=65 // loop_header_branch
                  %1400 = sbr.rel (%p1397) target = $region80
                $region77: #{tpu_custom_call.1} parent=65 // loop_body
                  %v1404 = vld [vmem:[%s1402] sm:$0xff]
                  %1405 = vst [vmem:[%s1403] sm:$0xff] %v1404
                  %s1406 = sadd.s32 1, %s1401
                  %p1407 = scmp.ge.s32.totalorder %s1406, %s1389
                  %s1408 = scalar_select %p1407, 0, %s1406
                  %s1409 = smul.u32 %s1408, 8
                  %s1410 = smul.u32 %s1408, 8
                  %s1411 = scalar_lea.vmem %s1392, %s1409 [#allocation2]
                  %s1412 = scalar_lea.vmem %s1394, %s1410
                $region78: #{tpu_custom_call.1} parent=65 // loop_footer
                  %s1398 = sadd.s32 %s1396, 1
                $region79: #{tpu_custom_call.1} parent=65 // loop_footer_branch
                  %1395 = sbr.rel target = $region75
                $region80: #{tpu_custom_call.1} parent=65 // loop_exit
                  _
              $region66: #{tpu_custom_call.1} parent=43 // pred_fallthru
                _
              // Predicated region
              $region81: #{tpu_custom_call.1} parent=43 // pred_check
                _
              $region82: #{tpu_custom_call.1} parent=43 // pred_check_branch
                %1414 = sbr.rel target = $region84
              $region83: #{tpu_custom_call.1} parent=43 // pred_region
                _
              $region84: #{tpu_custom_call.1} parent=43 // pred_fallthru
                _
            $region44: #{tpu_custom_call.1} parent=39 // pred_fallthru
              _
            // Predicated region
            $region45: #{tpu_custom_call.1} parent=39 // pred_check
              _
            $region46: #{tpu_custom_call.1} parent=39 // pred_check_branch
              %1197 = sbr.rel target = $region48
            $region47: #{tpu_custom_call.1} parent=39 // pred_region
              %s1199 = sshrl.u32 %s1186, 5
              // While loop
              $region49: #{tpu_custom_call.1} parent=47 // loop_pre_header
                _
              $region50: #{tpu_custom_call.1} parent=47 // loop_header
                %s1201 = sphi 0, %s1203
                %p1202 = scmp.ge.s32.totalorder %s1201, %s1199
                %s1206 = sphi 0, %s1275
                %s1207 = sphi %s1179, %s1278
                %s1208 = sphi %s1190, %s1279
              $region51: #{tpu_custom_call.1} parent=47 // loop_header_branch
                %1205 = sbr.rel (%p1202) target = $region55
              $region52: #{tpu_custom_call.1} parent=47 // loop_body
                %v1209 = vld [vmem:[%s1207] sm:$0xff]
                %1210 = vst [vmem:[%s1208] sm:$0xff] %v1209
                %v1211 = vld [vmem:[%s1207 + $0x8] sm:$0xff]
                %1212 = vst [vmem:[%s1208 + $0x8] sm:$0xff] %v1211
                %v1213 = vld [vmem:[%s1207 + $0x10] sm:$0xff]
                %1214 = vst [vmem:[%s1208 + $0x10] sm:$0xff] %v1213
                %v1215 = vld [vmem:[%s1207 + $0x18] sm:$0xff]
                %1216 = vst [vmem:[%s1208 + $0x18] sm:$0xff] %v1215
                %v1217 = vld [vmem:[%s1207 + $0x20] sm:$0xff]
                %1218 = vst [vmem:[%s1208 + $0x20] sm:$0xff] %v1217
                %v1219 = vld [vmem:[%s1207 + $0x28] sm:$0xff]
                %1220 = vst [vmem:[%s1208 + $0x28] sm:$0xff] %v1219
                %v1221 = vld [vmem:[%s1207 + $0x30] sm:$0xff]
                %1222 = vst [vmem:[%s1208 + $0x30] sm:$0xff] %v1221
                %v1223 = vld [vmem:[%s1207 + $0x38] sm:$0xff]
                %1224 = vst [vmem:[%s1208 + $0x38] sm:$0xff] %v1223
                %v1225 = vld [vmem:[%s1207 + $0x40] sm:$0xff]
                %1226 = vst [vmem:[%s1208 + $0x40] sm:$0xff] %v1225
                %v1227 = vld [vmem:[%s1207 + $0x48] sm:$0xff]
                %1228 = vst [vmem:[%s1208 + $0x48] sm:$0xff] %v1227
                %v1229 = vld [vmem:[%s1207 + $0x50] sm:$0xff]
                %1230 = vst [vmem:[%s1208 + $0x50] sm:$0xff] %v1229
                %v1231 = vld [vmem:[%s1207 + $0x58] sm:$0xff]
                %1232 = vst [vmem:[%s1208 + $0x58] sm:$0xff] %v1231
                %v1233 = vld [vmem:[%s1207 + $0x60] sm:$0xff]
                %1234 = vst [vmem:[%s1208 + $0x60] sm:$0xff] %v1233
                %v1235 = vld [vmem:[%s1207 + $0x68] sm:$0xff]
                %1236 = vst [vmem:[%s1208 + $0x68] sm:$0xff] %v1235
                %v1237 = vld [vmem:[%s1207 + $0x70] sm:$0xff]
                %1238 = vst [vmem:[%s1208 + $0x70] sm:$0xff] %v1237
                %v1239 = vld [vmem:[%s1207 + $0x78] sm:$0xff]
                %1240 = vst [vmem:[%s1208 + $0x78] sm:$0xff] %v1239
                %v1241 = vld [vmem:[%s1207 + $0x80] sm:$0xff]
                %1242 = vst [vmem:[%s1208 + $0x80] sm:$0xff] %v1241
                %v1243 = vld [vmem:[%s1207 + $0x88] sm:$0xff]
                %1244 = vst [vmem:[%s1208 + $0x88] sm:$0xff] %v1243
                %v1245 = vld [vmem:[%s1207 + $0x90] sm:$0xff]
                %1246 = vst [vmem:[%s1208 + $0x90] sm:$0xff] %v1245
                %v1247 = vld [vmem:[%s1207 + $0x98] sm:$0xff]
                %1248 = vst [vmem:[%s1208 + $0x98] sm:$0xff] %v1247
                %v1249 = vld [vmem:[%s1207 + $0xa0] sm:$0xff]
                %1250 = vst [vmem:[%s1208 + $0xa0] sm:$0xff] %v1249
                %v1251 = vld [vmem:[%s1207 + $0xa8] sm:$0xff]
                %1252 = vst [vmem:[%s1208 + $0xa8] sm:$0xff] %v1251
                %v1253 = vld [vmem:[%s1207 + $0xb0] sm:$0xff]
                %1254 = vst [vmem:[%s1208 + $0xb0] sm:$0xff] %v1253
                %v1255 = vld [vmem:[%s1207 + $0xb8] sm:$0xff]
                %1256 = vst [vmem:[%s1208 + $0xb8] sm:$0xff] %v1255
                %v1257 = vld [vmem:[%s1207 + $0xc0] sm:$0xff]
                %1258 = vst [vmem:[%s1208 + $0xc0] sm:$0xff] %v1257
                %v1259 = vld [vmem:[%s1207 + $0xc8] sm:$0xff]
                %1260 = vst [vmem:[%s1208 + $0xc8] sm:$0xff] %v1259
                %v1261 = vld [vmem:[%s1207 + $0xd0] sm:$0xff]
                %1262 = vst [vmem:[%s1208 + $0xd0] sm:$0xff] %v1261
                %v1263 = vld [vmem:[%s1207 + $0xd8] sm:$0xff]
                %1264 = vst [vmem:[%s1208 + $0xd8] sm:$0xff] %v1263
                %v1265 = vld [vmem:[%s1207 + $0xe0] sm:$0xff]
                %1266 = vst [vmem:[%s1208 + $0xe0] sm:$0xff] %v1265
                %v1267 = vld [vmem:[%s1207 + $0xe8] sm:$0xff]
                %1268 = vst [vmem:[%s1208 + $0xe8] sm:$0xff] %v1267
                %v1269 = vld [vmem:[%s1207 + $0xf0] sm:$0xff]
                %1270 = vst [vmem:[%s1208 + $0xf0] sm:$0xff] %v1269
                %v1271 = vld [vmem:[%s1207 + $0xf8] sm:$0xff]
                %1272 = vst [vmem:[%s1208 + $0xf8] sm:$0xff] %v1271
                %s1273 = sadd.s32 1, %s1206
                %p1274 = scmp.ge.s32.totalorder %s1273, %s1199
                %s1275 = scalar_select %p1274, 0, %s1273
                %s1276 = smul.u32 %s1275, 256
                %s1277 = smul.u32 %s1275, 256
                %s1278 = scalar_lea.vmem %s1179, %s1276 [#allocation2]
                %s1279 = scalar_lea.vmem %s1190, %s1277
              $region53: #{tpu_custom_call.1} parent=47 // loop_footer
                %s1203 = sadd.s32 %s1201, 1
              $region54: #{tpu_custom_call.1} parent=47 // loop_footer_branch
                %1200 = sbr.rel target = $region50
              $region55: #{tpu_custom_call.1} parent=47 // loop_exit
                _
              %s1280 = sshrl.u32 %s1186, 5
              %s1281 = sand.u32 %s1186, 31
              %s1282 = smul.u32 %s1280, 32
              %s1283 = smul.u32 8, %s1282
              %s1284 = scalar_lea.vmem %s1179, %s1283 [#allocation2]
              %s1285 = smul.u32 8, %s1282
              %s1286 = scalar_lea.vmem %s1190, %s1285
              // While loop
              $region56: #{tpu_custom_call.1} parent=47 // loop_pre_header
                _
              $region57: #{tpu_custom_call.1} parent=47 // loop_header
                %s1288 = sphi 0, %s1290
                %p1289 = scmp.ge.s32.totalorder %s1288, %s1281
                %s1293 = sphi 0, %s1300
                %s1294 = sphi %s1284, %s1303
                %s1295 = sphi %s1286, %s1304
              $region58: #{tpu_custom_call.1} parent=47 // loop_header_branch
                %1292 = sbr.rel (%p1289) target = $region62
              $region59: #{tpu_custom_call.1} parent=47 // loop_body
                %v1296 = vld [vmem:[%s1294] sm:$0xff]
                %1297 = vst [vmem:[%s1295] sm:$0xff] %v1296
                %s1298 = sadd.s32 1, %s1293
                %p1299 = scmp.ge.s32.totalorder %s1298, %s1281
                %s1300 = scalar_select %p1299, 0, %s1298
                %s1301 = smul.u32 %s1300, 8
                %s1302 = smul.u32 %s1300, 8
                %s1303 = scalar_lea.vmem %s1284, %s1301 [#allocation2]
                %s1304 = scalar_lea.vmem %s1286, %s1302
              $region60: #{tpu_custom_call.1} parent=47 // loop_footer
                %s1290 = sadd.s32 %s1288, 1
              $region61: #{tpu_custom_call.1} parent=47 // loop_footer_branch
                %1287 = sbr.rel target = $region57
              $region62: #{tpu_custom_call.1} parent=47 // loop_exit
                _
            $region48: #{tpu_custom_call.1} parent=39 // pred_fallthru
              _
          $region40: #{tpu_custom_call.1} parent=35 // pred_fallthru
            _
          %1415 = vnop
        $region36: #{tpu_custom_call.1} parent=31 // pred_fallthru
          _
      $region32: #{tpu_custom_call.1} parent=5 // pred_fallthru
        _
      %p1416 = scmp.le.s32.totalorder 2, %s9
      // Predicated region
      $region85: #{tpu_custom_call.1} parent=5 // pred_check
        %p1417 = pneg %p1416
      $region86: #{tpu_custom_call.1} parent=5 // pred_check_branch
        %1419 = sbr.rel (%p1417) target = $region88
      $region87: #{tpu_custom_call.1} parent=5 // pred_region
        %s1420 = ssub.s32 %s9, 2
        // Predicated region
        $region89: #{tpu_custom_call.1} parent=87 // pred_check
          %p1421 = pneg %p106
        $region90: #{tpu_custom_call.1} parent=87 // pred_check_branch
          %1423 = sbr.rel (%p1421) target = $region92
        $region91: #{tpu_custom_call.1} parent=87 // pred_region
          %s1424 = sand.u32 %s91, 1
          %s1425 = sand.u32 %s91, 1
          %s1426 = smul.addr %s1425, 256
          %s1427 = scalar_lea.vmem [#allocation2], %s1426
        $region92: #{tpu_custom_call.1} parent=87 // pred_fallthru
          _
      $region88: #{tpu_custom_call.1} parent=5 // pred_fallthru
        _
    $region6: #{tpu_custom_call.1} parent=1 // loop_footer
      %s13 = sadd.s32 1, %s9
    $region7: #{tpu_custom_call.1} parent=1 // loop_footer_branch
      %8 = sbr.rel target = $region3
    $region8: #{tpu_custom_call.1} parent=1 // loop_exit
      _

</llo_original>
